<compile_context>
chip_gen: v5e
topology: v5e:2x2
jax: 0.10.0
libtpu: 0.0.40
codegen_flags: <defaults>
</compile_context>

<pallas_src>
import math
from functools import partial

import jax
import jax.numpy as jnp
from jax import lax
from jax.experimental import pallas as pl
from jax.experimental.pallas import tpu as pltpu


_INV_SQRT2 = 1.0 / math.sqrt(2.0)
_SQRT_2_OVER_PI = math.sqrt(2.0 / math.pi)
_LN_EPS = 1e-5  # torch nn.LayerNorm default


def _round_up(x, m):
    return ((x + m - 1) // m) * m


def _gelu(y, approximate):
    """GELU. approximate=False is torch's exact erf form (default);
    approximate=True is the tanh form (EUP-friendly)."""
    if approximate:
        inner = _SQRT_2_OVER_PI * (y + 0.044715 * (y * y * y))
        return 0.5 * y * (1.0 + jnp.tanh(inner))
    return 0.5 * y * (1.0 + lax.erf(y * _INV_SQRT2))


def _default_row_chunk():
    """128 for v5e (4x128 MXU), 256 for v6e/v7x (2x256 MXU)."""
    try:
        kind = jax.devices()[0].device_kind.lower()
        if "v5 lite" in kind or "v5e" in kind or "v5lite" in kind:
            return 128
    except Exception:
        pass
    return 256


def _pick_batch_tiling(n, tile_b, row_chunk):
    """Choose (tile_b, row_chunk, n_pad).

    Goals from the perf review: large batch tiles (1-2K rows) to amortize
    per-grid-step overhead, >= 2 grid steps when possible (v7x megacore),
    bounded zero-padding waste.  All values multiples of 128 (lane dim)."""
    row_chunk = max(128, _round_up(int(row_chunk), 128))
    # Prefer >= 2 grid steps: cap row_chunk at half the 128-rounded batch.
    half = (_round_up(n, 128) // 2) // 128 * 128
    row_chunk = min(row_chunk, max(128, half))
    row_chunk = min(row_chunk, _round_up(n, 128))

    tile_b = max(row_chunk, _round_up(int(tile_b), row_chunk))
    n_rc = _round_up(n, row_chunk)
    tile_b = min(tile_b, n_rc)

    def _steps(tb):
        return _round_up(n_rc, tb) // tb

    def _waste(tb):
        return _round_up(n_rc, tb) - n_rc

    # Shrink (in row_chunk steps) until both TensorCores can get work (>=2
    # grid steps) and padding waste is modest.
    while tile_b > row_chunk and (
        _steps(tile_b) < 2 or _waste(tile_b) > max(n_rc // 4, row_chunk)
    ):
        tile_b -= row_chunk

    n_pad = _round_up(n, tile_b)
    return tile_b, row_chunk, n_pad


# --------------------------------------------------------------------------
# Fused Pallas kernel (built per layer-stack; shapes are static)
# --------------------------------------------------------------------------
def _make_fused_mlp_kernel(n_layers, row_chunk, num_chunks, gelu_approximate):
    """Kernel: h -> [Linear -> LayerNorm -> GELU] * (n-1) -> Linear.

    Activations are (features, batch_chunk): batch on the lane axis."""

    def kernel(x_ref, *refs):
        o_ref = refs[-1]
        layer_refs = refs[:-1]  # interleaved (w_ref, pack_ref) per layer

        # Hoist the bias/gamma/beta loads and their f32 casts out of the
        # (unrolled) chunk loop: JAX does not CSE these, so leaving them
        # inside would re-issue num_chunks * n_layers loads + casts.
        # (Broadcast to (f_out, row_chunk) stays at the use site to keep vreg
        # pressure low; weight loads stay in the loop — cheap vld, short
        # live range.)
        b_vals, g_vals, be_vals = [], [], []
        for i in range(n_layers):
            p = layer_refs[2 * i + 1][...].astype(jnp.float32)  # (f_out, 3)
            b_vals.append(p[:, 0:1])                            # bias   (f_out, 1)
            if i < n_layers - 1:
                g_vals.append(p[:, 1:2])                        # gamma
                be_vals.append(p[:, 2:3])                       # beta
            else:
                g_vals.append(None)
                be_vals.append(None)

        def chunk_body(c, carry):
            c0 = pl.multiple_of(c * row_chunk, row_chunk)
            # Lane-dense load: (d_in, row_chunk), batch on lanes.
            h = x_ref[:, pl.ds(c0, row_chunk)]
            for i in range(n_layers):
                w = layer_refs[2 * i][...]          # (f_out, f_in)
                h_mm = h if h.dtype == w.dtype else h.astype(w.dtype)
                # Linear on the MXU: (f_out, f_in) @ (f_in, row_chunk),
                # f32 accumulation, N = row_chunk output columns.
                y = jnp.dot(w, h_mm, preferred_element_type=jnp.float32)
                y = y + b_vals[i]                   # bias, lane-broadcast
                if i < n_layers - 1:
                    # LayerNorm over the feature (sublane) axis -> XLU,
                    # which is otherwise idle. Biased variance, eps=1e-5.
                    mean = jnp.mean(y, axis=0, keepdims=True)
                    var = jnp.mean((y - mean) * (y - mean), axis=0,
                                   keepdims=True)
                    y = (y - mean) * lax.rsqrt(var + _LN_EPS)
                    y = y * g_vals[i] + be_vals[i]
                    y = _gelu(y, gelu_approximate)
                h = y
            # Lane-dense store: full 128-lane vst, no masked partial stores.
            o_ref[:, pl.ds(c0, row_chunk)] = h.astype(o_ref.dtype)
            return carry

        lax.fori_loop(0, num_chunks, chunk_body, 0, unroll=True)

    return kernel


# --------------------------------------------------------------------------
# Wrapper: single pallas_call for the whole MLP
# --------------------------------------------------------------------------
def fused_mlp_pallas(x, params, *, tile_b=2048, row_chunk=256,
                     gelu_approximate=False):
    n, d_in = x.shape
    n_layers = len(params)
    d_out = params[-1]["w"].shape[0]  # weights are (out_features, in_features)

    tile_b, row_chunk, n_pad = _pick_batch_tiling(n, tile_b, row_chunk)
    num_chunks = tile_b // row_chunk
    grid = (n_pad // tile_b,)

    # Batch-on-lanes layout: transpose once in the wrapper (one extra HBM pass
    # on a small tensor) so every in-kernel load/store is lane-dense.
    xt = x.T                                   # (d_in, n)
    if n_pad != n:
        xt = jnp.pad(xt, ((0, 0), (0, n_pad - n)))

    flat_inputs = [xt]
    in_specs = [pl.BlockSpec((d_in, tile_b), lambda i: (0, i))]
    for p in params:
        fo, fi = p["w"].shape
        flat_inputs += [p["w"], p["pack"]]
        in_specs += [
            pl.BlockSpec((fo, fi), lambda i: (0, 0)),  # whole weight, resident
            pl.BlockSpec((fo, 3), lambda i: (0, 0)),   # packed bias/gamma/beta
        ]
    out_specs = pl.BlockSpec((d_out, tile_b), lambda i: (0, i))

    kernel = _make_fused_mlp_kernel(n_layers, row_chunk, num_chunks,
                                    gelu_approximate)

    # Advisory cost estimate for XLA scheduling.
    flops = 2 * n_pad * sum(p["w"].shape[0] * p["w"].shape[1] for p in params)
    transcendentals = n_pad * sum(p["w"].shape[0] for p in params[:-1])
    bytes_accessed = (
        jnp.dtype(x.dtype).itemsize * n_pad * (d_in + d_out)
        + sum(p["w"].size * jnp.dtype(p["w"].dtype).itemsize
              + p["pack"].size * jnp.dtype(p["pack"].dtype).itemsize
              for p in params)
    )

    # Explicit VMEM budget: dtype-aware (8/16/32-row) sublane padding,
    # double-buffered pipeline tiles, capped at 48 MiB (v7x headroom).
    def _pad_bytes(rows, cols, itemsize):
        sub = max(8, 32 // itemsize)
        return _round_up(rows, sub) * _round_up(cols, 128) * itemsize

    isz = jnp.dtype(x.dtype).itemsize
    vmem_est = 2 * (_pad_bytes(d_in, tile_b, isz)
                    + _pad_bytes(d_out, tile_b, isz))
    for p in params:
        fo, fi = p["w"].shape
        vmem_est += 2 * (_pad_bytes(fo, fi, jnp.dtype(p["w"].dtype).itemsize)
                         + _pad_bytes(fo, 3, jnp.dtype(p["pack"].dtype).itemsize))
    max_feat = max([d_in] + [p["w"].shape[0] for p in params])
    vmem_est += 8 * _pad_bytes(max_feat, row_chunk, 4)  # f32 working set
    vmem_limit = min(48 << 20, max(16 << 20, vmem_est + (4 << 20)))

    out_t = pl.pallas_call(
        kernel,
        out_shape=jax.ShapeDtypeStruct((d_out, n_pad), x.dtype),
        grid_spec=pltpu.PrefetchScalarGridSpec(
            num_scalar_prefetch=0,
            grid=grid,
            in_specs=in_specs,
            out_specs=out_specs,
        ),
        compiler_params=pltpu.CompilerParams(
            dimension_semantics=("parallel",),
            vmem_limit_bytes=vmem_limit,
        ),
        cost_estimate=pl.CostEstimate(
            flops=flops,
            transcendentals=transcendentals,
            bytes_accessed=bytes_accessed,
        ),
    )(*flat_inputs)

    return out_t[:, :n].T  # back to (batch, d_out)


@partial(jax.jit, static_argnames=("tile_b", "row_chunk", "gelu_approximate"))
def _general_mlp_forward_jit(x, params, *, tile_b, row_chunk,
                             gelu_approximate):
    return fused_mlp_pallas(x, params, tile_b=tile_b, row_chunk=row_chunk,
                            gelu_approximate=gelu_approximate)


def general_mlp_forward(x, params, *, tile_b=2048, row_chunk=None,
                        gelu_approximate=False):
    """Forward pass of generalMLP as a single fused Pallas kernel.

    gelu_approximate=False (default) matches torch nn.GELU() exactly (erf);
    True uses the tanh approximation (faster: transcendental goes to the EUP).
    """
    if row_chunk is None:
        row_chunk = _default_row_chunk()
    return _general_mlp_forward_jit(x, params, tile_b=int(tile_b),
                                    row_chunk=int(row_chunk),
                                    gelu_approximate=bool(gelu_approximate))


# --------------------------------------------------------------------------
# Parameter construction (matches torch layer shapes / defaults)
# --------------------------------------------------------------------------
def init_general_mlp_params(
    key,
    input_dim=64,
    output_dim=16,
    hidden_feature_list=(16, 32, 32, 16),
    dtype=jnp.float32,
):
    """Linear weights use torch's 1/sqrt(fan_in) uniform bound; LayerNorm
    gamma=1, beta=0. Weights stored torch-style as (out_features, in_features).
    Per layer, bias/gamma/beta are packed into one (out_features, 3) array
    (final layer carries dummy gamma/beta columns, ignored by the kernel)."""
    feature_list = (input_dim,) + tuple(hidden_feature_list) + (output_dim,)
    params = []
    n_layers = len(feature_list) - 1
    for i in range(n_layers):
        fan_in, fan_out = feature_list[i], feature_list[i + 1]
        key, kw, kb = jax.random.split(key, 3)
        bound = 1.0 / math.sqrt(fan_in)
        w = jax.random.uniform(kw, (fan_out, fan_in), dtype, -bound, bound)
        b = jax.random.uniform(kb, (fan_out, 1), dtype, -bound, bound)
        gamma = jnp.ones((fan_out, 1), dtype)
        beta = jnp.zeros((fan_out, 1), dtype)
        pack = jnp.concatenate([b, gamma, beta], axis=1)  # (fan_out, 3)
        params.append({"w": w, "pack": pack})
    return params


# --------------------------------------------------------------------------
# Pure-JAX reference for sanity checking
# --------------------------------------------------------------------------
def general_mlp_ref(x, params, *, gelu_approximate=False):
    n_layers = len(params)
    for i, p in enumerate(params):
        y = x @ p["w"].T + p["pack"][:, 0][None, :]
        if i < n_layers - 1:
            mean = jnp.mean(y, axis=-1, keepdims=True)
            var = jnp.mean((y - mean) ** 2, axis=-1, keepdims=True)
            y = (y - mean) / jnp.sqrt(var + _LN_EPS)
            y = y * p["pack"][:, 1][None, :] + p["pack"][:, 2][None, :]
            y = _gelu(y, gelu_approximate)
        x = y
    return x


# --------------------------------------------------------------------------
if __name__ == "__main__":
    key = jax.random.PRNGKey(0)
    k_params, k_x, k_x2 = jax.random.split(key, 3)

    input_dim, output_dim = 64, 16
    hidden = (16, 32, 32, 16)

    params = init_general_mlp_params(
        k_params,
        input_dim=input_dim,
        output_dim=output_dim,
        hidden_feature_list=hidden,
    )

    # Case 1: torch-exact erf GELU, batch not a multiple of 128 -> exercises
    # padding and the >=2-grid-step (megacore) path.
    x = jax.random.normal(k_x, (500, input_dim), dtype=jnp.float32)
    out = jax.block_until_ready(general_mlp_forward(x, params))
    ref = general_mlp_ref(x, params, gelu_approximate=False)
    assert out.shape == (500, output_dim), out.shape
    assert jnp.allclose(out, ref, atol=1e-4, rtol=1e-4), (
        float(jnp.max(jnp.abs(out - ref)))
    )

    # Case 2: tanh-approximate (EUP) GELU with tiling that exercises the
    # unrolled inner chunk loop (num_chunks > 1) plus batch padding.
    # Slightly looser tolerance: EUP tanh vs XLA tanh rounding.
    x2 = jax.random.normal(k_x2, (1111, input_dim), dtype=jnp.float32)
    out2 = jax.block_until_ready(
        general_mlp_forward(x2, params, tile_b=1024, row_chunk=128,
                            gelu_approximate=True))
    ref2 = general_mlp_ref(x2, params, gelu_approximate=True)
    assert out2.shape == (1111, output_dim), out2.shape
    assert jnp.allclose(out2, ref2, atol=1e-3, rtol=1e-3), (
        float(jnp.max(jnp.abs(out2 - ref2)))
    )

    print("KERNEL_OK")
</pallas_src>

<mosaic_0001>
module attributes {stable_mosaic.version = 11 : i64} {
  func.func @kernel(%arg0: i32, %arg1: memref<64x256xf32, #tpu.memory_space<vmem>>, %arg2: memref<16x64xf32, #tpu.memory_space<vmem>>, %arg3: memref<16x3xf32, #tpu.memory_space<vmem>>, %arg4: memref<32x16xf32, #tpu.memory_space<vmem>>, %arg5: memref<32x3xf32, #tpu.memory_space<vmem>>, %arg6: memref<32x32xf32, #tpu.memory_space<vmem>>, %arg7: memref<32x3xf32, #tpu.memory_space<vmem>>, %arg8: memref<16x32xf32, #tpu.memory_space<vmem>>, %arg9: memref<16x3xf32, #tpu.memory_space<vmem>>, %arg10: memref<16x16xf32, #tpu.memory_space<vmem>>, %arg11: memref<16x3xf32, #tpu.memory_space<vmem>>, %arg12: memref<16x256xf32, #tpu.memory_space<vmem>>) attributes {dimension_semantics = [#tpu.dimension_semantics<parallel>], iteration_bounds = array<i64: 2>, scalar_prefetch = 0 : i64, scratch_operands = 0 : i64, tpu.core_type = #tpu.core_type<tc>, window_params = [{transform_indices = @transform_0, window_bounds = array<i64: 64, 256>}, {pipeline_mode = #tpu.pipeline_mode<synchronous>, transform_indices = @transform_1, window_bounds = array<i64: 16, 64>}, {pipeline_mode = #tpu.pipeline_mode<synchronous>, transform_indices = @transform_2, window_bounds = array<i64: 16, 3>}, {pipeline_mode = #tpu.pipeline_mode<synchronous>, transform_indices = @transform_3, window_bounds = array<i64: 32, 16>}, {pipeline_mode = #tpu.pipeline_mode<synchronous>, transform_indices = @transform_4, window_bounds = array<i64: 32, 3>}, {pipeline_mode = #tpu.pipeline_mode<synchronous>, transform_indices = @transform_5, window_bounds = array<i64: 32, 32>}, {pipeline_mode = #tpu.pipeline_mode<synchronous>, transform_indices = @transform_6, window_bounds = array<i64: 32, 3>}, {pipeline_mode = #tpu.pipeline_mode<synchronous>, transform_indices = @transform_7, window_bounds = array<i64: 16, 32>}, {pipeline_mode = #tpu.pipeline_mode<synchronous>, transform_indices = @transform_8, window_bounds = array<i64: 16, 3>}, {pipeline_mode = #tpu.pipeline_mode<synchronous>, transform_indices = @transform_9, window_bounds = array<i64: 16, 16>}, {pipeline_mode = #tpu.pipeline_mode<synchronous>, transform_indices = @transform_10, window_bounds = array<i64: 16, 3>}, {transform_indices = @transform_11, window_bounds = array<i64: 16, 256>}]} {
    %c0 = arith.constant 0 : index
    %c0_0 = arith.constant 0 : index
    %0 = vector.load %arg3[%c0, %c0_0] : memref<16x3xf32, #tpu.memory_space<vmem>>, vector<16x3xf32>
    %1 = vector.extract_strided_slice %0 {offsets = [0, 0], sizes = [16, 1], strides = [1, 1]} : vector<16x3xf32> to vector<16x1xf32>
    %2 = vector.extract_strided_slice %0 {offsets = [0, 1], sizes = [16, 1], strides = [1, 1]} : vector<16x3xf32> to vector<16x1xf32>
    %3 = vector.extract_strided_slice %0 {offsets = [0, 2], sizes = [16, 1], strides = [1, 1]} : vector<16x3xf32> to vector<16x1xf32>
    %c0_1 = arith.constant 0 : index
    %c0_2 = arith.constant 0 : index
    %4 = vector.load %arg5[%c0_1, %c0_2] : memref<32x3xf32, #tpu.memory_space<vmem>>, vector<32x3xf32>
    %5 = vector.extract_strided_slice %4 {offsets = [0, 0], sizes = [32, 1], strides = [1, 1]} : vector<32x3xf32> to vector<32x1xf32>
    %6 = vector.extract_strided_slice %4 {offsets = [0, 1], sizes = [32, 1], strides = [1, 1]} : vector<32x3xf32> to vector<32x1xf32>
    %7 = vector.extract_strided_slice %4 {offsets = [0, 2], sizes = [32, 1], strides = [1, 1]} : vector<32x3xf32> to vector<32x1xf32>
    %c0_3 = arith.constant 0 : index
    %c0_4 = arith.constant 0 : index
    %8 = vector.load %arg7[%c0_3, %c0_4] : memref<32x3xf32, #tpu.memory_space<vmem>>, vector<32x3xf32>
    %9 = vector.extract_strided_slice %8 {offsets = [0, 0], sizes = [32, 1], strides = [1, 1]} : vector<32x3xf32> to vector<32x1xf32>
    %10 = vector.extract_strided_slice %8 {offsets = [0, 1], sizes = [32, 1], strides = [1, 1]} : vector<32x3xf32> to vector<32x1xf32>
    %11 = vector.extract_strided_slice %8 {offsets = [0, 2], sizes = [32, 1], strides = [1, 1]} : vector<32x3xf32> to vector<32x1xf32>
    %c0_5 = arith.constant 0 : index
    %c0_6 = arith.constant 0 : index
    %12 = vector.load %arg9[%c0_5, %c0_6] : memref<16x3xf32, #tpu.memory_space<vmem>>, vector<16x3xf32>
    %13 = vector.extract_strided_slice %12 {offsets = [0, 0], sizes = [16, 1], strides = [1, 1]} : vector<16x3xf32> to vector<16x1xf32>
    %14 = vector.extract_strided_slice %12 {offsets = [0, 1], sizes = [16, 1], strides = [1, 1]} : vector<16x3xf32> to vector<16x1xf32>
    %15 = vector.extract_strided_slice %12 {offsets = [0, 2], sizes = [16, 1], strides = [1, 1]} : vector<16x3xf32> to vector<16x1xf32>
    %c0_7 = arith.constant 0 : index
    %c0_8 = arith.constant 0 : index
    %16 = vector.load %arg11[%c0_7, %c0_8] : memref<16x3xf32, #tpu.memory_space<vmem>>, vector<16x3xf32>
    %17 = vector.extract_strided_slice %16 {offsets = [0, 0], sizes = [16, 1], strides = [1, 1]} : vector<16x3xf32> to vector<16x1xf32>
    %c0_i32 = arith.constant 0 : i32
    %c256_i32 = arith.constant 256 : i32
    %18 = arith.muli %c0_i32, %c256_i32 : i32
    %19 = tpu.assume_multiple %18, 256 : i32
    %c0_9 = arith.constant 0 : index
    %20 = arith.index_cast %19 : i32 to index
    %21 = vector.load %arg1[%c0_9, %20] : memref<64x256xf32, #tpu.memory_space<vmem>>, vector<64x256xf32>
    %c0_10 = arith.constant 0 : index
    %c0_11 = arith.constant 0 : index
    %22 = vector.load %arg2[%c0_10, %c0_11] : memref<16x64xf32, #tpu.memory_space<vmem>>, vector<16x64xf32>
    %cst = arith.constant dense<0.000000e+00> : vector<16x256xf32>
    %23 = tpu.matmul %22, %21, %cst {dimension_numbers = #tpu.dot_dimension_numbers<[1], [0], [0], [1], [0, 0, 1, 1], [], []>} : vector<16x64xf32>, vector<64x256xf32>, vector<16x256xf32> -> vector<16x256xf32>
    %24 = vector.broadcast %1 : vector<16x1xf32> to vector<16x256xf32>
    %25 = arith.addf %23, %24 : vector<16x256xf32>
    %cst_12 = arith.constant dense<0.000000e+00> : vector<256xf32>
    %26 = vector.multi_reduction <add>, %25, %cst_12 [0] : vector<16x256xf32> to vector<256xf32>
    %27 = vector.shape_cast %26 : vector<256xf32> to vector<1x256xf32>
    %cst_13 = arith.constant 1.600000e+01 : f32
    %28 = vector.broadcast %cst_13 : f32 to vector<1x256xf32>
    %29 = arith.divf %27, %28 : vector<1x256xf32>
    %30 = vector.broadcast %29 : vector<1x256xf32> to vector<16x256xf32>
    %31 = arith.subf %25, %30 : vector<16x256xf32>
    %32 = vector.broadcast %29 : vector<1x256xf32> to vector<16x256xf32>
    %33 = arith.subf %25, %32 : vector<16x256xf32>
    %34 = arith.mulf %31, %33 : vector<16x256xf32>
    %cst_14 = arith.constant dense<0.000000e+00> : vector<256xf32>
    %35 = vector.multi_reduction <add>, %34, %cst_14 [0] : vector<16x256xf32> to vector<256xf32>
    %36 = vector.shape_cast %35 : vector<256xf32> to vector<1x256xf32>
    %cst_15 = arith.constant 1.600000e+01 : f32
    %37 = vector.broadcast %cst_15 : f32 to vector<1x256xf32>
    %38 = arith.divf %36, %37 : vector<1x256xf32>
    %39 = vector.broadcast %29 : vector<1x256xf32> to vector<16x256xf32>
    %40 = arith.subf %25, %39 : vector<16x256xf32>
    %cst_16 = arith.constant 9.99999974E-6 : f32
    %41 = vector.broadcast %cst_16 : f32 to vector<1x256xf32>
    %42 = arith.addf %38, %41 : vector<1x256xf32>
    %43 = math.rsqrt %42 : vector<1x256xf32>
    %44 = vector.broadcast %43 : vector<1x256xf32> to vector<16x256xf32>
    %45 = arith.mulf %40, %44 : vector<16x256xf32>
    %46 = vector.broadcast %2 : vector<16x1xf32> to vector<16x256xf32>
    %47 = arith.mulf %45, %46 : vector<16x256xf32>
    %48 = vector.broadcast %3 : vector<16x1xf32> to vector<16x256xf32>
    %49 = arith.addf %47, %48 : vector<16x256xf32>
    %cst_17 = arith.constant 5.000000e-01 : f32
    %50 = vector.broadcast %cst_17 : f32 to vector<16x256xf32>
    %51 = arith.mulf %50, %49 : vector<16x256xf32>
    %cst_18 = arith.constant 0.707106769 : f32
    %52 = vector.broadcast %cst_18 : f32 to vector<16x256xf32>
    %53 = arith.mulf %49, %52 : vector<16x256xf32>
    %54 = math.erf %53 : vector<16x256xf32>
    %cst_19 = arith.constant 1.000000e+00 : f32
    %55 = vector.broadcast %cst_19 : f32 to vector<16x256xf32>
    %56 = arith.addf %55, %54 : vector<16x256xf32>
    %57 = arith.mulf %51, %56 : vector<16x256xf32>
    %c0_20 = arith.constant 0 : index
    %c0_21 = arith.constant 0 : index
    %58 = vector.load %arg4[%c0_20, %c0_21] : memref<32x16xf32, #tpu.memory_space<vmem>>, vector<32x16xf32>
    %cst_22 = arith.constant dense<0.000000e+00> : vector<32x256xf32>
    %59 = tpu.matmul %58, %57, %cst_22 {dimension_numbers = #tpu.dot_dimension_numbers<[1], [0], [0], [1], [0, 0, 1, 1], [], []>} : vector<32x16xf32>, vector<16x256xf32>, vector<32x256xf32> -> vector<32x256xf32>
    %60 = vector.broadcast %5 : vector<32x1xf32> to vector<32x256xf32>
    %61 = arith.addf %59, %60 : vector<32x256xf32>
    %cst_23 = arith.constant dense<0.000000e+00> : vector<256xf32>
    %62 = vector.multi_reduction <add>, %61, %cst_23 [0] : vector<32x256xf32> to vector<256xf32>
    %63 = vector.shape_cast %62 : vector<256xf32> to vector<1x256xf32>
    %cst_24 = arith.constant 3.200000e+01 : f32
    %64 = vector.broadcast %cst_24 : f32 to vector<1x256xf32>
    %65 = arith.divf %63, %64 : vector<1x256xf32>
    %66 = vector.broadcast %65 : vector<1x256xf32> to vector<32x256xf32>
    %67 = arith.subf %61, %66 : vector<32x256xf32>
    %68 = vector.broadcast %65 : vector<1x256xf32> to vector<32x256xf32>
    %69 = arith.subf %61, %68 : vector<32x256xf32>
    %70 = arith.mulf %67, %69 : vector<32x256xf32>
    %cst_25 = arith.constant dense<0.000000e+00> : vector<256xf32>
    %71 = vector.multi_reduction <add>, %70, %cst_25 [0] : vector<32x256xf32> to vector<256xf32>
    %72 = vector.shape_cast %71 : vector<256xf32> to vector<1x256xf32>
    %cst_26 = arith.constant 3.200000e+01 : f32
    %73 = vector.broadcast %cst_26 : f32 to vector<1x256xf32>
    %74 = arith.divf %72, %73 : vector<1x256xf32>
    %75 = vector.broadcast %65 : vector<1x256xf32> to vector<32x256xf32>
    %76 = arith.subf %61, %75 : vector<32x256xf32>
    %cst_27 = arith.constant 9.99999974E-6 : f32
    %77 = vector.broadcast %cst_27 : f32 to vector<1x256xf32>
    %78 = arith.addf %74, %77 : vector<1x256xf32>
    %79 = math.rsqrt %78 : vector<1x256xf32>
    %80 = vector.broadcast %79 : vector<1x256xf32> to vector<32x256xf32>
    %81 = arith.mulf %76, %80 : vector<32x256xf32>
    %82 = vector.broadcast %6 : vector<32x1xf32> to vector<32x256xf32>
    %83 = arith.mulf %81, %82 : vector<32x256xf32>
    %84 = vector.broadcast %7 : vector<32x1xf32> to vector<32x256xf32>
    %85 = arith.addf %83, %84 : vector<32x256xf32>
    %cst_28 = arith.constant 5.000000e-01 : f32
    %86 = vector.broadcast %cst_28 : f32 to vector<32x256xf32>
    %87 = arith.mulf %86, %85 : vector<32x256xf32>
    %cst_29 = arith.constant 0.707106769 : f32
    %88 = vector.broadcast %cst_29 : f32 to vector<32x256xf32>
    %89 = arith.mulf %85, %88 : vector<32x256xf32>
    %90 = math.erf %89 : vector<32x256xf32>
    %cst_30 = arith.constant 1.000000e+00 : f32
    %91 = vector.broadcast %cst_30 : f32 to vector<32x256xf32>
    %92 = arith.addf %91, %90 : vector<32x256xf32>
    %93 = arith.mulf %87, %92 : vector<32x256xf32>
    %c0_31 = arith.constant 0 : index
    %c0_32 = arith.constant 0 : index
    %94 = vector.load %arg6[%c0_31, %c0_32] : memref<32x32xf32, #tpu.memory_space<vmem>>, vector<32x32xf32>
    %cst_33 = arith.constant dense<0.000000e+00> : vector<32x256xf32>
    %95 = tpu.matmul %94, %93, %cst_33 {dimension_numbers = #tpu.dot_dimension_numbers<[1], [0], [0], [1], [0, 0, 1, 1], [], []>} : vector<32x32xf32>, vector<32x256xf32>, vector<32x256xf32> -> vector<32x256xf32>
    %96 = vector.broadcast %9 : vector<32x1xf32> to vector<32x256xf32>
    %97 = arith.addf %95, %96 : vector<32x256xf32>
    %cst_34 = arith.constant dense<0.000000e+00> : vector<256xf32>
    %98 = vector.multi_reduction <add>, %97, %cst_34 [0] : vector<32x256xf32> to vector<256xf32>
    %99 = vector.shape_cast %98 : vector<256xf32> to vector<1x256xf32>
    %cst_35 = arith.constant 3.200000e+01 : f32
    %100 = vector.broadcast %cst_35 : f32 to vector<1x256xf32>
    %101 = arith.divf %99, %100 : vector<1x256xf32>
    %102 = vector.broadcast %101 : vector<1x256xf32> to vector<32x256xf32>
    %103 = arith.subf %97, %102 : vector<32x256xf32>
    %104 = vector.broadcast %101 : vector<1x256xf32> to vector<32x256xf32>
    %105 = arith.subf %97, %104 : vector<32x256xf32>
    %106 = arith.mulf %103, %105 : vector<32x256xf32>
    %cst_36 = arith.constant dense<0.000000e+00> : vector<256xf32>
    %107 = vector.multi_reduction <add>, %106, %cst_36 [0] : vector<32x256xf32> to vector<256xf32>
    %108 = vector.shape_cast %107 : vector<256xf32> to vector<1x256xf32>
    %cst_37 = arith.constant 3.200000e+01 : f32
    %109 = vector.broadcast %cst_37 : f32 to vector<1x256xf32>
    %110 = arith.divf %108, %109 : vector<1x256xf32>
    %111 = vector.broadcast %101 : vector<1x256xf32> to vector<32x256xf32>
    %112 = arith.subf %97, %111 : vector<32x256xf32>
    %cst_38 = arith.constant 9.99999974E-6 : f32
    %113 = vector.broadcast %cst_38 : f32 to vector<1x256xf32>
    %114 = arith.addf %110, %113 : vector<1x256xf32>
    %115 = math.rsqrt %114 : vector<1x256xf32>
    %116 = vector.broadcast %115 : vector<1x256xf32> to vector<32x256xf32>
    %117 = arith.mulf %112, %116 : vector<32x256xf32>
    %118 = vector.broadcast %10 : vector<32x1xf32> to vector<32x256xf32>
    %119 = arith.mulf %117, %118 : vector<32x256xf32>
    %120 = vector.broadcast %11 : vector<32x1xf32> to vector<32x256xf32>
    %121 = arith.addf %119, %120 : vector<32x256xf32>
    %cst_39 = arith.constant 5.000000e-01 : f32
    %122 = vector.broadcast %cst_39 : f32 to vector<32x256xf32>
    %123 = arith.mulf %122, %121 : vector<32x256xf32>
    %cst_40 = arith.constant 0.707106769 : f32
    %124 = vector.broadcast %cst_40 : f32 to vector<32x256xf32>
    %125 = arith.mulf %121, %124 : vector<32x256xf32>
    %126 = math.erf %125 : vector<32x256xf32>
    %cst_41 = arith.constant 1.000000e+00 : f32
    %127 = vector.broadcast %cst_41 : f32 to vector<32x256xf32>
    %128 = arith.addf %127, %126 : vector<32x256xf32>
    %129 = arith.mulf %123, %128 : vector<32x256xf32>
    %c0_42 = arith.constant 0 : index
    %c0_43 = arith.constant 0 : index
    %130 = vector.load %arg8[%c0_42, %c0_43] : memref<16x32xf32, #tpu.memory_space<vmem>>, vector<16x32xf32>
    %cst_44 = arith.constant dense<0.000000e+00> : vector<16x256xf32>
    %131 = tpu.matmul %130, %129, %cst_44 {dimension_numbers = #tpu.dot_dimension_numbers<[1], [0], [0], [1], [0, 0, 1, 1], [], []>} : vector<16x32xf32>, vector<32x256xf32>, vector<16x256xf32> -> vector<16x256xf32>
    %132 = vector.broadcast %13 : vector<16x1xf32> to vector<16x256xf32>
    %133 = arith.addf %131, %132 : vector<16x256xf32>
    %cst_45 = arith.constant dense<0.000000e+00> : vector<256xf32>
    %134 = vector.multi_reduction <add>, %133, %cst_45 [0] : vector<16x256xf32> to vector<256xf32>
    %135 = vector.shape_cast %134 : vector<256xf32> to vector<1x256xf32>
    %cst_46 = arith.constant 1.600000e+01 : f32
    %136 = vector.broadcast %cst_46 : f32 to vector<1x256xf32>
    %137 = arith.divf %135, %136 : vector<1x256xf32>
    %138 = vector.broadcast %137 : vector<1x256xf32> to vector<16x256xf32>
    %139 = arith.subf %133, %138 : vector<16x256xf32>
    %140 = vector.broadcast %137 : vector<1x256xf32> to vector<16x256xf32>
    %141 = arith.subf %133, %140 : vector<16x256xf32>
    %142 = arith.mulf %139, %141 : vector<16x256xf32>
    %cst_47 = arith.constant dense<0.000000e+00> : vector<256xf32>
    %143 = vector.multi_reduction <add>, %142, %cst_47 [0] : vector<16x256xf32> to vector<256xf32>
    %144 = vector.shape_cast %143 : vector<256xf32> to vector<1x256xf32>
    %cst_48 = arith.constant 1.600000e+01 : f32
    %145 = vector.broadcast %cst_48 : f32 to vector<1x256xf32>
    %146 = arith.divf %144, %145 : vector<1x256xf32>
    %147 = vector.broadcast %137 : vector<1x256xf32> to vector<16x256xf32>
    %148 = arith.subf %133, %147 : vector<16x256xf32>
    %cst_49 = arith.constant 9.99999974E-6 : f32
    %149 = vector.broadcast %cst_49 : f32 to vector<1x256xf32>
    %150 = arith.addf %146, %149 : vector<1x256xf32>
    %151 = math.rsqrt %150 : vector<1x256xf32>
    %152 = vector.broadcast %151 : vector<1x256xf32> to vector<16x256xf32>
    %153 = arith.mulf %148, %152 : vector<16x256xf32>
    %154 = vector.broadcast %14 : vector<16x1xf32> to vector<16x256xf32>
    %155 = arith.mulf %153, %154 : vector<16x256xf32>
    %156 = vector.broadcast %15 : vector<16x1xf32> to vector<16x256xf32>
    %157 = arith.addf %155, %156 : vector<16x256xf32>
    %cst_50 = arith.constant 5.000000e-01 : f32
    %158 = vector.broadcast %cst_50 : f32 to vector<16x256xf32>
    %159 = arith.mulf %158, %157 : vector<16x256xf32>
    %cst_51 = arith.constant 0.707106769 : f32
    %160 = vector.broadcast %cst_51 : f32 to vector<16x256xf32>
    %161 = arith.mulf %157, %160 : vector<16x256xf32>
    %162 = math.erf %161 : vector<16x256xf32>
    %cst_52 = arith.constant 1.000000e+00 : f32
    %163 = vector.broadcast %cst_52 : f32 to vector<16x256xf32>
    %164 = arith.addf %163, %162 : vector<16x256xf32>
    %165 = arith.mulf %159, %164 : vector<16x256xf32>
    %c0_53 = arith.constant 0 : index
    %c0_54 = arith.constant 0 : index
    %166 = vector.load %arg10[%c0_53, %c0_54] : memref<16x16xf32, #tpu.memory_space<vmem>>, vector<16x16xf32>
    %cst_55 = arith.constant dense<0.000000e+00> : vector<16x256xf32>
    %167 = tpu.matmul %166, %165, %cst_55 {dimension_numbers = #tpu.dot_dimension_numbers<[1], [0], [0], [1], [0, 0, 1, 1], [], []>} : vector<16x16xf32>, vector<16x256xf32>, vector<16x256xf32> -> vector<16x256xf32>
    %168 = vector.broadcast %17 : vector<16x1xf32> to vector<16x256xf32>
    %169 = arith.addf %167, %168 : vector<16x256xf32>
    %c0_56 = arith.constant 0 : index
    %170 = arith.index_cast %19 : i32 to index
    %171 = vector.load %arg12[%c0_56, %170] : memref<16x256xf32, #tpu.memory_space<vmem>>, vector<16x256xf32>
    tpu.vector_store %arg12[%c0_56, %170], %169 {strides = array<i32>} : memref<16x256xf32, #tpu.memory_space<vmem>>, vector<16x256xf32>,
    %c1_i32 = arith.constant 1 : i32
    return
  }
  func.func @transform_0(%arg0: i32) -> (i32, i32) {
    %c0_i32 = arith.constant 0 : i32
    %c0_i32_0 = arith.constant 0 : i32
    return %c0_i32, %arg0 : i32, i32
  }
  func.func @transform_1(%arg0: i32) -> (i32, i32) {
    %c0_i32 = arith.constant 0 : i32
    %c0_i32_0 = arith.constant 0 : i32
    %c0_i32_1 = arith.constant 0 : i32
    return %c0_i32, %c0_i32_0 : i32, i32
  }
  func.func @transform_2(%arg0: i32) -> (i32, i32) {
    %c0_i32 = arith.constant 0 : i32
    %c0_i32_0 = arith.constant 0 : i32
    %c0_i32_1 = arith.constant 0 : i32
    return %c0_i32, %c0_i32_0 : i32, i32
  }
  func.func @transform_3(%arg0: i32) -> (i32, i32) {
    %c0_i32 = arith.constant 0 : i32
    %c0_i32_0 = arith.constant 0 : i32
    %c0_i32_1 = arith.constant 0 : i32
    return %c0_i32, %c0_i32_0 : i32, i32
  }
  func.func @transform_4(%arg0: i32) -> (i32, i32) {
    %c0_i32 = arith.constant 0 : i32
    %c0_i32_0 = arith.constant 0 : i32
    %c0_i32_1 = arith.constant 0 : i32
    return %c0_i32, %c0_i32_0 : i32, i32
  }
  func.func @transform_5(%arg0: i32) -> (i32, i32) {
    %c0_i32 = arith.constant 0 : i32
    %c0_i32_0 = arith.constant 0 : i32
    %c0_i32_1 = arith.constant 0 : i32
    return %c0_i32, %c0_i32_0 : i32, i32
  }
  func.func @transform_6(%arg0: i32) -> (i32, i32) {
    %c0_i32 = arith.constant 0 : i32
    %c0_i32_0 = arith.constant 0 : i32
    %c0_i32_1 = arith.constant 0 : i32
    return %c0_i32, %c0_i32_0 : i32, i32
  }
  func.func @transform_7(%arg0: i32) -> (i32, i32) {
    %c0_i32 = arith.constant 0 : i32
    %c0_i32_0 = arith.constant 0 : i32
    %c0_i32_1 = arith.constant 0 : i32
    return %c0_i32, %c0_i32_0 : i32, i32
  }
  func.func @transform_8(%arg0: i32) -> (i32, i32) {
    %c0_i32 = arith.constant 0 : i32
    %c0_i32_0 = arith.constant 0 : i32
    %c0_i32_1 = arith.constant 0 : i32
    return %c0_i32, %c0_i32_0 : i32, i32
  }
  func.func @transform_9(%arg0: i32) -> (i32, i32) {
    %c0_i32 = arith.constant 0 : i32
    %c0_i32_0 = arith.constant 0 : i32
    %c0_i32_1 = arith.constant 0 : i32
    return %c0_i32, %c0_i32_0 : i32, i32
  }
  func.func @transform_10(%arg0: i32) -> (i32, i32) {
    %c0_i32 = arith.constant 0 : i32
    %c0_i32_0 = arith.constant 0 : i32
    %c0_i32_1 = arith.constant 0 : i32
    return %c0_i32, %c0_i32_0 : i32, i32
  }
  func.func @transform_11(%arg0: i32) -> (i32, i32) {
    %c0_i32 = arith.constant 0 : i32
    %c0_i32_0 = arith.constant 0 : i32
    return %c0_i32, %arg0 : i32, i32
  }
}

</mosaic_0001>

<llo_original>
// kernel: _general_mlp_forward_jit.1
$region0: #{_general_mlp_forward_jit.1}
  #allocation0 [shape = 'u32[]', space=smem, size = 0x4, offset = 0x4, fixed_abs, tag = 'smem constant byte address 0x4 - core index']
  #allocation1 [shape = 'u32[72,128]{1,0:T(1,128)}', space=vmem, size = 0x9000, scoped, tag = 'internal scratch']
  %s0 = inlined_call_operand.vmem [shape: f32[64,512], index: 0, kind: input, shape index: {}]
  %s1 = inlined_call_operand.vmem [shape: f32[16,64], index: 1, kind: input, shape index: {}]
  %s2 = inlined_call_operand.vmem [shape: f32[16,3], index: 2, kind: input, shape index: {}]
  %s3 = inlined_call_operand.vmem [shape: f32[32,16], index: 3, kind: input, shape index: {}]
  %s4 = inlined_call_operand.vmem [shape: f32[32,3], index: 4, kind: input, shape index: {}]
  %s5 = inlined_call_operand.vmem [shape: f32[32,32], index: 5, kind: input, shape index: {}]
  %s6 = inlined_call_operand.vmem [shape: f32[32,3], index: 6, kind: input, shape index: {}]
  %s7 = inlined_call_operand.vmem [shape: f32[16,32], index: 7, kind: input, shape index: {}]
  %s8 = inlined_call_operand.vmem [shape: f32[16,3], index: 8, kind: input, shape index: {}]
  %s9 = inlined_call_operand.vmem [shape: f32[16,16], index: 9, kind: input, shape index: {}]
  %s10 = inlined_call_operand.vmem [shape: f32[16,3], index: 10, kind: input, shape index: {}]
  %s11 = inlined_call_operand.vmem [shape: f32[16,512], index: 11, kind: output, shape index: {}]
  %s12 = sld [smem:[#allocation0]]
  $region119: #{_general_mlp_forward_jit.1} parent=0
    _
  %s14 = ssub.s32 1, %s12
  %s15 = scalar_select 0, %s14, %s12
  $region1: #{_general_mlp_forward_jit.1} parent=0
    #allocation2 [shape = 'u8[131072]{0}', space=vmem, size = 0x20000, scoped, tag = 'input window, operand 0']
    #allocation3 [shape = 'u8[32768]{0}', space=vmem, size = 0x8000, scoped, tag = 'output window, operand 0']
    loop: start=0, step=1, limit=4
    $region2: #{_general_mlp_forward_jit.1} parent=1 // loop_pre_header
      _
    $region3: #{_general_mlp_forward_jit.1} parent=1 // loop_header
      %s17 = sphi 0, %s21
      %p18 = scmp.ge.s32.totalorder %s17, 4
      %s27 = sphi 0, %s29
      %s30 = sphi 0, %s27
      %s31 = sphi 0, %s30
      %s47 = sphi 0, %s31
      %s51 = sphi 0, %s51
      %s53 = sphi 0, %s51
      %s54 = sphi 0, %s53
      %s68 = sphi 0, %s54
      %s72 = sphi 0, %s72
      %s74 = sphi 0, %s72
      %s75 = sphi 0, %s74
      %s89 = sphi 0, %s75
      %s93 = sphi 0, %s93
      %s95 = sphi 0, %s93
      %s96 = sphi 0, %s95
      %s110 = sphi 0, %s96
      %s114 = sphi 0, %s114
      %s116 = sphi 0, %s114
      %s117 = sphi 0, %s116
      %s131 = sphi 0, %s117
      %s135 = sphi 0, %s135
      %s137 = sphi 0, %s135
      %s138 = sphi 0, %s137
      %s152 = sphi 0, %s138
      %s156 = sphi 0, %s156
      %s158 = sphi 0, %s156
      %s159 = sphi 0, %s158
      %s173 = sphi 0, %s159
      %s177 = sphi 0, %s177
      %s179 = sphi 0, %s177
      %s180 = sphi 0, %s179
      %s194 = sphi 0, %s180
      %s198 = sphi 0, %s198
      %s200 = sphi 0, %s198
      %s201 = sphi 0, %s200
      %s215 = sphi 0, %s201
      %s219 = sphi 0, %s219
      %s221 = sphi 0, %s219
      %s222 = sphi 0, %s221
      %s236 = sphi 0, %s222
      %s240 = sphi 0, %s240
      %s242 = sphi 0, %s240
      %s243 = sphi 0, %s242
      %s257 = sphi 0, %s243
      %s263 = sphi 0, %s265
      %s266 = sphi 0, %s263
      %s267 = sphi 0, %s266
      %s283 = sphi 0, %s267
    $region4: #{_general_mlp_forward_jit.1} parent=1 // loop_header_branch
      %20 = sbr.rel (%p18) target = $region8
    $region5: #{_general_mlp_forward_jit.1} parent=1 // loop_body
      %s22 = ssub.s32 %s17, 1
      %s23 = ssub.s32 %s17, 2
      %s24 = sadd.s32 %s17, 1
      %s25 = ssub.s32 %s17, %s24
      %p26 = scmp.eq.s32.totalorder %s25, 0
      %s28 = sadd.s32 %s27, 1
      %s29 = scalar_select %p26, %s27, %s28
      %p32 = pneg %p26
      %p33 = scmp.eq.s32.totalorder %s17, 1
      %p34 = por %p32, %p33
      %p35 = scmp.ne.s32.totalorder %s27, %s30
      %p36 = scmp.eq.s32.totalorder %s17, 0
      %p37 = por %p35, %p36
      %p38 = scmp.ne.s32.totalorder %s27, %s30
      %p39 = scmp.eq.s32.totalorder %s22, 1
      %p40 = por %p38, %p39
      %p41 = scmp.ne.s32.totalorder %s30, %s31
      %p42 = scmp.eq.s32.totalorder %s22, 0
      %p43 = por %p41, %p42
      %p44 = scmp.ne.s32.totalorder %s30, %s31
      %p45 = scmp.eq.s32.totalorder %s23, 1
      %p46 = por %p44, %p45
      %p48 = scmp.ne.s32.totalorder %s31, %s47
      %p49 = scmp.eq.s32.totalorder %s23, 0
      %p50 = por %p48, %p49
      %s52 = sadd.s32 %s51, 1
      %p55 = scmp.eq.s32.totalorder %s17, 1
      %p56 = scmp.ne.s32.totalorder %s51, %s53
      %p57 = scmp.eq.s32.totalorder %s17, 0
      %p58 = por %p56, %p57
      %p59 = scmp.ne.s32.totalorder %s51, %s53
      %p60 = scmp.eq.s32.totalorder %s22, 1
      %p61 = por %p59, %p60
      %p62 = scmp.ne.s32.totalorder %s53, %s54
      %p63 = scmp.eq.s32.totalorder %s22, 0
      %p64 = por %p62, %p63
      %p65 = scmp.ne.s32.totalorder %s53, %s54
      %p66 = scmp.eq.s32.totalorder %s23, 1
      %p67 = por %p65, %p66
      %p69 = scmp.ne.s32.totalorder %s54, %s68
      %p70 = scmp.eq.s32.totalorder %s23, 0
      %p71 = por %p69, %p70
      %s73 = sadd.s32 %s72, 1
      %p76 = scmp.eq.s32.totalorder %s17, 1
      %p77 = scmp.ne.s32.totalorder %s72, %s74
      %p78 = scmp.eq.s32.totalorder %s17, 0
      %p79 = por %p77, %p78
      %p80 = scmp.ne.s32.totalorder %s72, %s74
      %p81 = scmp.eq.s32.totalorder %s22, 1
      %p82 = por %p80, %p81
      %p83 = scmp.ne.s32.totalorder %s74, %s75
      %p84 = scmp.eq.s32.totalorder %s22, 0
      %p85 = por %p83, %p84
      %p86 = scmp.ne.s32.totalorder %s74, %s75
      %p87 = scmp.eq.s32.totalorder %s23, 1
      %p88 = por %p86, %p87
      %p90 = scmp.ne.s32.totalorder %s75, %s89
      %p91 = scmp.eq.s32.totalorder %s23, 0
      %p92 = por %p90, %p91
      %s94 = sadd.s32 %s93, 1
      %p97 = scmp.eq.s32.totalorder %s17, 1
      %p98 = scmp.ne.s32.totalorder %s93, %s95
      %p99 = scmp.eq.s32.totalorder %s17, 0
      %p100 = por %p98, %p99
      %p101 = scmp.ne.s32.totalorder %s93, %s95
      %p102 = scmp.eq.s32.totalorder %s22, 1
      %p103 = por %p101, %p102
      %p104 = scmp.ne.s32.totalorder %s95, %s96
      %p105 = scmp.eq.s32.totalorder %s22, 0
      %p106 = por %p104, %p105
      %p107 = scmp.ne.s32.totalorder %s95, %s96
      %p108 = scmp.eq.s32.totalorder %s23, 1
      %p109 = por %p107, %p108
      %p111 = scmp.ne.s32.totalorder %s96, %s110
      %p112 = scmp.eq.s32.totalorder %s23, 0
      %p113 = por %p111, %p112
      %s115 = sadd.s32 %s114, 1
      %p118 = scmp.eq.s32.totalorder %s17, 1
      %p119 = scmp.ne.s32.totalorder %s114, %s116
      %p120 = scmp.eq.s32.totalorder %s17, 0
      %p121 = por %p119, %p120
      %p122 = scmp.ne.s32.totalorder %s114, %s116
      %p123 = scmp.eq.s32.totalorder %s22, 1
      %p124 = por %p122, %p123
      %p125 = scmp.ne.s32.totalorder %s116, %s117
      %p126 = scmp.eq.s32.totalorder %s22, 0
      %p127 = por %p125, %p126
      %p128 = scmp.ne.s32.totalorder %s116, %s117
      %p129 = scmp.eq.s32.totalorder %s23, 1
      %p130 = por %p128, %p129
      %p132 = scmp.ne.s32.totalorder %s117, %s131
      %p133 = scmp.eq.s32.totalorder %s23, 0
      %p134 = por %p132, %p133
      %s136 = sadd.s32 %s135, 1
      %p139 = scmp.eq.s32.totalorder %s17, 1
      %p140 = scmp.ne.s32.totalorder %s135, %s137
      %p141 = scmp.eq.s32.totalorder %s17, 0
      %p142 = por %p140, %p141
      %p143 = scmp.ne.s32.totalorder %s135, %s137
      %p144 = scmp.eq.s32.totalorder %s22, 1
      %p145 = por %p143, %p144
      %p146 = scmp.ne.s32.totalorder %s137, %s138
      %p147 = scmp.eq.s32.totalorder %s22, 0
      %p148 = por %p146, %p147
      %p149 = scmp.ne.s32.totalorder %s137, %s138
      %p150 = scmp.eq.s32.totalorder %s23, 1
      %p151 = por %p149, %p150
      %p153 = scmp.ne.s32.totalorder %s138, %s152
      %p154 = scmp.eq.s32.totalorder %s23, 0
      %p155 = por %p153, %p154
      %s157 = sadd.s32 %s156, 1
      %p160 = scmp.eq.s32.totalorder %s17, 1
      %p161 = scmp.ne.s32.totalorder %s156, %s158
      %p162 = scmp.eq.s32.totalorder %s17, 0
      %p163 = por %p161, %p162
      %p164 = scmp.ne.s32.totalorder %s156, %s158
      %p165 = scmp.eq.s32.totalorder %s22, 1
      %p166 = por %p164, %p165
      %p167 = scmp.ne.s32.totalorder %s158, %s159
      %p168 = scmp.eq.s32.totalorder %s22, 0
      %p169 = por %p167, %p168
      %p170 = scmp.ne.s32.totalorder %s158, %s159
      %p171 = scmp.eq.s32.totalorder %s23, 1
      %p172 = por %p170, %p171
      %p174 = scmp.ne.s32.totalorder %s159, %s173
      %p175 = scmp.eq.s32.totalorder %s23, 0
      %p176 = por %p174, %p175
      %s178 = sadd.s32 %s177, 1
      %p181 = scmp.eq.s32.totalorder %s17, 1
      %p182 = scmp.ne.s32.totalorder %s177, %s179
      %p183 = scmp.eq.s32.totalorder %s17, 0
      %p184 = por %p182, %p183
      %p185 = scmp.ne.s32.totalorder %s177, %s179
      %p186 = scmp.eq.s32.totalorder %s22, 1
      %p187 = por %p185, %p186
      %p188 = scmp.ne.s32.totalorder %s179, %s180
      %p189 = scmp.eq.s32.totalorder %s22, 0
      %p190 = por %p188, %p189
      %p191 = scmp.ne.s32.totalorder %s179, %s180
      %p192 = scmp.eq.s32.totalorder %s23, 1
      %p193 = por %p191, %p192
      %p195 = scmp.ne.s32.totalorder %s180, %s194
      %p196 = scmp.eq.s32.totalorder %s23, 0
      %p197 = por %p195, %p196
      %s199 = sadd.s32 %s198, 1
      %p202 = scmp.eq.s32.totalorder %s17, 1
      %p203 = scmp.ne.s32.totalorder %s198, %s200
      %p204 = scmp.eq.s32.totalorder %s17, 0
      %p205 = por %p203, %p204
      %p206 = scmp.ne.s32.totalorder %s198, %s200
      %p207 = scmp.eq.s32.totalorder %s22, 1
      %p208 = por %p206, %p207
      %p209 = scmp.ne.s32.totalorder %s200, %s201
      %p210 = scmp.eq.s32.totalorder %s22, 0
      %p211 = por %p209, %p210
      %p212 = scmp.ne.s32.totalorder %s200, %s201
      %p213 = scmp.eq.s32.totalorder %s23, 1
      %p214 = por %p212, %p213
      %p216 = scmp.ne.s32.totalorder %s201, %s215
      %p217 = scmp.eq.s32.totalorder %s23, 0
      %p218 = por %p216, %p217
      %s220 = sadd.s32 %s219, 1
      %p223 = scmp.eq.s32.totalorder %s17, 1
      %p224 = scmp.ne.s32.totalorder %s219, %s221
      %p225 = scmp.eq.s32.totalorder %s17, 0
      %p226 = por %p224, %p225
      %p227 = scmp.ne.s32.totalorder %s219, %s221
      %p228 = scmp.eq.s32.totalorder %s22, 1
      %p229 = por %p227, %p228
      %p230 = scmp.ne.s32.totalorder %s221, %s222
      %p231 = scmp.eq.s32.totalorder %s22, 0
      %p232 = por %p230, %p231
      %p233 = scmp.ne.s32.totalorder %s221, %s222
      %p234 = scmp.eq.s32.totalorder %s23, 1
      %p235 = por %p233, %p234
      %p237 = scmp.ne.s32.totalorder %s222, %s236
      %p238 = scmp.eq.s32.totalorder %s23, 0
      %p239 = por %p237, %p238
      %s241 = sadd.s32 %s240, 1
      %p244 = scmp.eq.s32.totalorder %s17, 1
      %p245 = scmp.ne.s32.totalorder %s240, %s242
      %p246 = scmp.eq.s32.totalorder %s17, 0
      %p247 = por %p245, %p246
      %p248 = scmp.ne.s32.totalorder %s240, %s242
      %p249 = scmp.eq.s32.totalorder %s22, 1
      %p250 = por %p248, %p249
      %p251 = scmp.ne.s32.totalorder %s242, %s243
      %p252 = scmp.eq.s32.totalorder %s22, 0
      %p253 = por %p251, %p252
      %p254 = scmp.ne.s32.totalorder %s242, %s243
      %p255 = scmp.eq.s32.totalorder %s23, 1
      %p256 = por %p254, %p255
      %p258 = scmp.ne.s32.totalorder %s243, %s257
      %p259 = scmp.eq.s32.totalorder %s23, 0
      %p260 = por %p258, %p259
      %s261 = ssub.s32 %s17, %s24
      %p262 = scmp.eq.s32.totalorder %s261, 0
      %s264 = sadd.s32 %s263, 1
      %s265 = scalar_select %p262, %s263, %s264
      %p268 = pneg %p262
      %p269 = scmp.eq.s32.totalorder %s17, 1
      %p270 = por %p268, %p269
      %p271 = scmp.ne.s32.totalorder %s263, %s266
      %p272 = scmp.eq.s32.totalorder %s17, 0
      %p273 = por %p271, %p272
      %p274 = scmp.ne.s32.totalorder %s263, %s266
      %p275 = scmp.eq.s32.totalorder %s22, 1
      %p276 = por %p274, %p275
      %p277 = scmp.ne.s32.totalorder %s266, %s267
      %p278 = scmp.eq.s32.totalorder %s22, 0
      %p279 = por %p277, %p278
      %p280 = scmp.ne.s32.totalorder %s266, %s267
      %p281 = scmp.eq.s32.totalorder %s23, 1
      %p282 = por %p280, %p281
      %p284 = scmp.ne.s32.totalorder %s267, %s283
      %p285 = scmp.eq.s32.totalorder %s23, 0
      %p286 = por %p284, %p285
      %p287 = scmp.le.s32.totalorder 1, %s17
      %p288 = scmp.lt.s32.totalorder %s17, 3
      %p289 = pnand %p287, %p288
      %p290 = pneg %p289
      // Predicated region
      $region9: #{_general_mlp_forward_jit.1} parent=5 // pred_check
        _
      $region10: #{_general_mlp_forward_jit.1} parent=5 // pred_check_branch
        %292 = sbr.rel (%p289) target = $region12
      $region11: #{_general_mlp_forward_jit.1} parent=5 // pred_region
        %s293 = ssub.s32 %s17, 1
        // Predicated region
        $region13: #{_general_mlp_forward_jit.1} parent=11 // pred_check
          %p294 = pneg %p64
        $region14: #{_general_mlp_forward_jit.1} parent=11 // pred_check_branch
          %296 = sbr.rel (%p294) target = $region16
        $region15: #{_general_mlp_forward_jit.1} parent=11 // pred_region
          _
        $region16: #{_general_mlp_forward_jit.1} parent=11 // pred_fallthru
          _
        // Predicated region
        $region17: #{_general_mlp_forward_jit.1} parent=11 // pred_check
          %p297 = pneg %p85
        $region18: #{_general_mlp_forward_jit.1} parent=11 // pred_check_branch
          %299 = sbr.rel (%p297) target = $region20
        $region19: #{_general_mlp_forward_jit.1} parent=11 // pred_region
          _
        $region20: #{_general_mlp_forward_jit.1} parent=11 // pred_fallthru
          _
        // Predicated region
        $region21: #{_general_mlp_forward_jit.1} parent=11 // pred_check
          %p300 = pneg %p106
        $region22: #{_general_mlp_forward_jit.1} parent=11 // pred_check_branch
          %302 = sbr.rel (%p300) target = $region24
        $region23: #{_general_mlp_forward_jit.1} parent=11 // pred_region
          _
        $region24: #{_general_mlp_forward_jit.1} parent=11 // pred_fallthru
          _
        // Predicated region
        $region25: #{_general_mlp_forward_jit.1} parent=11 // pred_check
          %p303 = pneg %p127
        $region26: #{_general_mlp_forward_jit.1} parent=11 // pred_check_branch
          %305 = sbr.rel (%p303) target = $region28
        $region27: #{_general_mlp_forward_jit.1} parent=11 // pred_region
          _
        $region28: #{_general_mlp_forward_jit.1} parent=11 // pred_fallthru
          _
        // Predicated region
        $region29: #{_general_mlp_forward_jit.1} parent=11 // pred_check
          %p306 = pneg %p148
        $region30: #{_general_mlp_forward_jit.1} parent=11 // pred_check_branch
          %308 = sbr.rel (%p306) target = $region32
        $region31: #{_general_mlp_forward_jit.1} parent=11 // pred_region
          _
        $region32: #{_general_mlp_forward_jit.1} parent=11 // pred_fallthru
          _
        // Predicated region
        $region33: #{_general_mlp_forward_jit.1} parent=11 // pred_check
          %p309 = pneg %p169
        $region34: #{_general_mlp_forward_jit.1} parent=11 // pred_check_branch
          %311 = sbr.rel (%p309) target = $region36
        $region35: #{_general_mlp_forward_jit.1} parent=11 // pred_region
          _
        $region36: #{_general_mlp_forward_jit.1} parent=11 // pred_fallthru
          _
        // Predicated region
        $region37: #{_general_mlp_forward_jit.1} parent=11 // pred_check
          %p312 = pneg %p190
        $region38: #{_general_mlp_forward_jit.1} parent=11 // pred_check_branch
          %314 = sbr.rel (%p312) target = $region40
        $region39: #{_general_mlp_forward_jit.1} parent=11 // pred_region
          _
        $region40: #{_general_mlp_forward_jit.1} parent=11 // pred_fallthru
          _
        // Predicated region
        $region41: #{_general_mlp_forward_jit.1} parent=11 // pred_check
          %p315 = pneg %p211
        $region42: #{_general_mlp_forward_jit.1} parent=11 // pred_check_branch
          %317 = sbr.rel (%p315) target = $region44
        $region43: #{_general_mlp_forward_jit.1} parent=11 // pred_region
          _
        $region44: #{_general_mlp_forward_jit.1} parent=11 // pred_fallthru
          _
        // Predicated region
        $region45: #{_general_mlp_forward_jit.1} parent=11 // pred_check
          %p318 = pneg %p232
        $region46: #{_general_mlp_forward_jit.1} parent=11 // pred_check_branch
          %320 = sbr.rel (%p318) target = $region48
        $region47: #{_general_mlp_forward_jit.1} parent=11 // pred_region
          _
        $region48: #{_general_mlp_forward_jit.1} parent=11 // pred_fallthru
          _
        // Predicated region
        $region49: #{_general_mlp_forward_jit.1} parent=11 // pred_check
          %p321 = pneg %p253
        $region50: #{_general_mlp_forward_jit.1} parent=11 // pred_check_branch
          %323 = sbr.rel (%p321) target = $region52
        $region51: #{_general_mlp_forward_jit.1} parent=11 // pred_region
          _
        $region52: #{_general_mlp_forward_jit.1} parent=11 // pred_fallthru
          _
      $region12: #{_general_mlp_forward_jit.1} parent=5 // pred_fallthru
        _
      %p324 = scmp.lt.s32.totalorder %s17, 2
      // Predicated region
      $region53: #{_general_mlp_forward_jit.1} parent=5 // pred_check
        %p325 = pneg %p324
      $region54: #{_general_mlp_forward_jit.1} parent=5 // pred_check_branch
        %327 = sbr.rel (%p325) target = $region56
      $region55: #{_general_mlp_forward_jit.1} parent=5 // pred_region
        // Predicated region
        $region57: #{_general_mlp_forward_jit.1} parent=55 // pred_check
          %p328 = pneg %p37
        $region58: #{_general_mlp_forward_jit.1} parent=55 // pred_check_branch
          %330 = sbr.rel (%p328) target = $region60
        $region59: #{_general_mlp_forward_jit.1} parent=55 // pred_region
          %s331 = sand.u32 %s27, 1
          %s332 = sand.u32 %s27, 1
          %s333 = smul.addr %s332, 128
          %s334 = scalar_lea.vmem [#allocation2], %s333
          %s335 = smul.u32 2, %s17
          %s336 = smul.addr %s335, 8
          %s337 = scalar_lea.vmem %s0, %s336
          // Predicated region
          $region61: #{_general_mlp_forward_jit.1} parent=59 // pred_check
            _
          $region62: #{_general_mlp_forward_jit.1} parent=59 // pred_check_branch
            %339 = sbr.rel (0) target = $region64
          $region63: #{_general_mlp_forward_jit.1} parent=59 // pred_region
            // Predicated region
            $region65: #{_general_mlp_forward_jit.1} parent=63 // pred_check
              _
            $region66: #{_general_mlp_forward_jit.1} parent=63 // pred_check_branch
              %341 = sbr.rel (0) target = $region68
            $region67: #{_general_mlp_forward_jit.1} parent=63 // pred_region
              loop: start=0, step=1, limit=1
              $region69: #{_general_mlp_forward_jit.1} parent=67 // loop_pre_header
                _
              $region70: #{_general_mlp_forward_jit.1} parent=67 // loop_header
                %s343 = sphi 0, %s347
                %p344 = scmp.ge.s32.totalorder %s343, 1
                %s348 = sphi %s337, %s337
                %s349 = sphi %s334, %s334
              $region71: #{_general_mlp_forward_jit.1} parent=67 // loop_header_branch
                %346 = sbr.rel (%p344) target = $region75
              $region72: #{_general_mlp_forward_jit.1} parent=67 // loop_body
                %v350 = vld [vmem:[%s348] sm:$0xff]
                %351 = vst [vmem:[%s349] sm:$0xff] %v350
                %v352 = vld [vmem:[%s348 + $0x8] sm:$0xff]
                %353 = vst [vmem:[%s349 + $0x8] sm:$0xff] %v352
                %v354 = vld [vmem:[%s348 + $0x20] sm:$0xff]
                %355 = vst [vmem:[%s349 + $0x10] sm:$0xff] %v354
                %v356 = vld [vmem:[%s348 + $0x28] sm:$0xff]
                %357 = vst [vmem:[%s349 + $0x18] sm:$0xff] %v356
                %v358 = vld [vmem:[%s348 + $0x40] sm:$0xff]
                %359 = vst [vmem:[%s349 + $0x20] sm:$0xff] %v358
                %v360 = vld [vmem:[%s348 + $0x48] sm:$0xff]
                %361 = vst [vmem:[%s349 + $0x28] sm:$0xff] %v360
                %v362 = vld [vmem:[%s348 + $0x60] sm:$0xff]
                %363 = vst [vmem:[%s349 + $0x30] sm:$0xff] %v362
                %v364 = vld [vmem:[%s348 + $0x68] sm:$0xff]
                %365 = vst [vmem:[%s349 + $0x38] sm:$0xff] %v364
                %v366 = vld [vmem:[%s348 + $0x80] sm:$0xff]
                %367 = vst [vmem:[%s349 + $0x40] sm:$0xff] %v366
                %v368 = vld [vmem:[%s348 + $0x88] sm:$0xff]
                %369 = vst [vmem:[%s349 + $0x48] sm:$0xff] %v368
                %v370 = vld [vmem:[%s348 + $0xa0] sm:$0xff]
                %371 = vst [vmem:[%s349 + $0x50] sm:$0xff] %v370
                %v372 = vld [vmem:[%s348 + $0xa8] sm:$0xff]
                %373 = vst [vmem:[%s349 + $0x58] sm:$0xff] %v372
                %v374 = vld [vmem:[%s348 + $0xc0] sm:$0xff]
                %375 = vst [vmem:[%s349 + $0x60] sm:$0xff] %v374
                %v376 = vld [vmem:[%s348 + $0xc8] sm:$0xff]
                %377 = vst [vmem:[%s349 + $0x68] sm:$0xff] %v376
                %v378 = vld [vmem:[%s348 + $0xe0] sm:$0xff]
                %379 = vst [vmem:[%s349 + $0x70] sm:$0xff] %v378
                %v380 = vld [vmem:[%s348 + $0xe8] sm:$0xff]
                %381 = vst [vmem:[%s349 + $0x78] sm:$0xff] %v380
              $region73: #{_general_mlp_forward_jit.1} parent=67 // loop_footer
                %s347 = sadd.s32 1, %s343
              $region74: #{_general_mlp_forward_jit.1} parent=67 // loop_footer_branch
                %342 = sbr.rel target = $region70
              $region75: #{_general_mlp_forward_jit.1} parent=67 // loop_exit
                _
            $region68: #{_general_mlp_forward_jit.1} parent=63 // pred_fallthru
              _
            // Predicated region
            $region76: #{_general_mlp_forward_jit.1} parent=63 // pred_check
              _
            $region77: #{_general_mlp_forward_jit.1} parent=63 // pred_check_branch
              %383 = sbr.rel target = $region79
            $region78: #{_general_mlp_forward_jit.1} parent=63 // pred_region
              _
            $region79: #{_general_mlp_forward_jit.1} parent=63 // pred_fallthru
              _
          $region64: #{_general_mlp_forward_jit.1} parent=59 // pred_fallthru
            _
          %384 = vnop
        $region60: #{_general_mlp_forward_jit.1} parent=55 // pred_fallthru
          _
      $region56: #{_general_mlp_forward_jit.1} parent=5 // pred_fallthru
        _
      %p385 = scmp.le.s32.totalorder 1, %s17
      %p386 = scmp.lt.s32.totalorder %s17, 3
      %p387 = pnand %p385, %p386
      %p388 = pneg %p387
      // Predicated region
      $region80: #{_general_mlp_forward_jit.1} parent=5 // pred_check
        _
      $region81: #{_general_mlp_forward_jit.1} parent=5 // pred_check_branch
        %390 = sbr.rel (%p387) target = $region83
      $region82: #{_general_mlp_forward_jit.1} parent=5 // pred_region
        %s391 = ssub.s32 %s17, 1
        %s392 = sand.u32 %s30, 1
        %s393 = sand.u32 %s30, 1
        %s394 = smul.addr %s393, 128
        %s395 = scalar_lea.vmem [#allocation2], %s394
        // Predicated region
        $region84: #{_general_mlp_forward_jit.1} parent=82 // pred_check
          %p396 = pneg %p43
        $region85: #{_general_mlp_forward_jit.1} parent=82 // pred_check_branch
          %398 = sbr.rel (%p396) target = $region87
        $region86: #{_general_mlp_forward_jit.1} parent=82 // pred_region
          _
        $region87: #{_general_mlp_forward_jit.1} parent=82 // pred_fallthru
          _
        %s399 = sand.u32 %s30, 1
        %s400 = sand.u32 %s30, 1
        %s401 = smul.addr %s400, 128
        %s402 = scalar_lea.vmem [#allocation2], %s401
        %p403 = pneg %p43
        %p404 = pneg %p40
        %p405 = pneg %p64
        %p406 = pneg %p61
        %p407 = pneg %p85
        %p408 = pneg %p82
        %p409 = pneg %p106
        %p410 = pneg %p103
        %p411 = pneg %p127
        %p412 = pneg %p124
        %p413 = pneg %p148
        %p414 = pneg %p145
        %p415 = pneg %p169
        %p416 = pneg %p166
        %p417 = pneg %p190
        %p418 = pneg %p187
        %p419 = pneg %p211
        %p420 = pneg %p208
        %p421 = pneg %p232
        %p422 = pneg %p229
        %p423 = pneg %p253
        %p424 = pneg %p250
        %p425 = pneg %p279
        %p426 = pneg %p276
        %s427 = sand.u32 %s266, 1
        %s428 = sand.u32 %s266, 1
        %s429 = smul.addr %s428, 32
        %s430 = scalar_lea.vmem [#allocation3], %s429
        %s431 = smul.u32 2, %s22
        %s432 = smul.u32 2, %s22
        %v433 = vld [vmem:[%s2] sm:$0xff]
        %v434 = vld [vmem:[%s2 + $0x8] sm:$0xff]
        %v435 = vld [vmem:[%s4] sm:$0xff]
        %v436 = vld [vmem:[%s4 + $0x8] sm:$0xff]
        %v437 = vld [vmem:[%s4 + $0x10] sm:$0xff]
        %v438 = vld [vmem:[%s4 + $0x18] sm:$0xff]
        %v439 = vld [vmem:[%s6] sm:$0xff]
        %v440 = vld [vmem:[%s6 + $0x8] sm:$0xff]
        %v441 = vld [vmem:[%s6 + $0x10] sm:$0xff]
        %v442 = vld [vmem:[%s6 + $0x18] sm:$0xff]
        %v443 = vld [vmem:[%s8] sm:$0xff]
        %v444 = vld [vmem:[%s8 + $0x8] sm:$0xff]
        %v445 = vld [vmem:[%s10] sm:$0xff]
        %v446 = vld [vmem:[%s10 + $0x8] sm:$0xff]
        %v447 = vld [vmem:[%s395] sm:$0xff]
        %v448 = vld [vmem:[%s395 + $0x8] sm:$0xff]
        %v449 = vld [vmem:[%s395 + $0x10] sm:$0xff]
        %v450 = vld [vmem:[%s395 + $0x18] sm:$0xff]
        %v451 = vld [vmem:[%s395 + $0x20] sm:$0xff]
        %v452 = vld [vmem:[%s395 + $0x28] sm:$0xff]
        %v453 = vld [vmem:[%s395 + $0x30] sm:$0xff]
        %v454 = vld [vmem:[%s395 + $0x38] sm:$0xff]
        %v455 = vld [vmem:[%s395 + $0x40] sm:$0xff]
        %v456 = vld [vmem:[%s395 + $0x48] sm:$0xff]
        %v457 = vld [vmem:[%s395 + $0x50] sm:$0xff]
        %v458 = vld [vmem:[%s395 + $0x58] sm:$0xff]
        %v459 = vld [vmem:[%s395 + $0x60] sm:$0xff]
        %v460 = vld [vmem:[%s395 + $0x68] sm:$0xff]
        %v461 = vld [vmem:[%s395 + $0x70] sm:$0xff]
        %v462 = vld [vmem:[%s395 + $0x78] sm:$0xff]
        %v463 = vld [vmem:[%s1] sm:$0xff]
        %v464 = vld [vmem:[%s1 + $0x8] sm:$0xff]
        %466 = vset.pattern.permute.xlu0 0
        %467 = vperm.xlu0 %466, %v433
        %v468 = vpop.permute.xlu0 %467
        %471 = vset.pattern.permute.xlu0 0
        %472 = vperm.xlu0 %471, %v434
        %v473 = vpop.permute.xlu0 %472
        %vm475 = vcmask 523264
        %v477 = vsel %vm475, %v463, 0
        %v480 = vsel %vm475, %v464, 0
        %482 = vmatpush.msra.mxu0 0.0
        %483 = vmatpush.msra.mxu0 0.0
        %484 = vmatpush.msra.mxu0 0.0
        %485 = vmatpush.msra.mxu0 0.0
        %486 = vmatpush.msra.mxu0 0.0
        %487 = vmatpush.msra.mxu0 0.0
        %488 = vmatpush.msra.mxu0 0.0
        %489 = vmatpush.msra.mxu0 0.0
        %490 = vmatpush.msra.mxu0 %v461
        %491 = vmatpush.msra.mxu0 %v459
        %492 = vmatpush.msra.mxu0 %v457
        %493 = vmatpush.msra.mxu0 %v455
        %494 = vmatpush.msra.mxu0 %v453
        %495 = vmatpush.msra.mxu0 %v451
        %496 = vmatpush.msra.mxu0 %v449
        %497 = vmatpush.msra.mxu0 %v447
        %498 = vmatmul.f32.gmra.mxu0 %v477
        %v499 = vpop.f32.mrf.mxu0
        %v500 = vadd.f32 %v468, %v499
        %501 = vmatmul.f32.gmra.mxu0 %v480
        %v502 = vpop.f32.mrf.mxu0
        %v503 = vadd.f32 %v473, %v502
        %504 = vdwg.mxu0
        %505 = vmatpush.msra.mxu0 0.0
        %506 = vmatpush.msra.mxu0 0.0
        %507 = vmatpush.msra.mxu0 0.0
        %508 = vmatpush.msra.mxu0 0.0
        %509 = vmatpush.msra.mxu0 0.0
        %510 = vmatpush.msra.mxu0 0.0
        %511 = vmatpush.msra.mxu0 0.0
        %512 = vmatpush.msra.mxu0 0.0
        %513 = vmatpush.msra.mxu0 %v462
        %514 = vmatpush.msra.mxu0 %v460
        %515 = vmatpush.msra.mxu0 %v458
        %516 = vmatpush.msra.mxu0 %v456
        %517 = vmatpush.msra.mxu0 %v454
        %518 = vmatpush.msra.mxu0 %v452
        %519 = vmatpush.msra.mxu0 %v450
        %520 = vmatpush.msra.mxu0 %v448
        %521 = vmatmul.f32.gmra.mxu0 %v477
        %v522 = vpop.f32.mrf.mxu0
        %v523 = vadd.f32 %v468, %v522
        %524 = vmatmul.f32.gmra.mxu0 %v480
        %v525 = vpop.f32.mrf.mxu0
        %v526 = vadd.f32 %v473, %v525
        %527 = vdwg.mxu0
        %v528 = vadd.f32 %v500, %v503
        %v529 = vrot.slane %v528, 4
        %v530 = vadd.f32 %v528, %v529
        %v531 = vrot.slane %v530, 2
        %v532 = vadd.f32 %v530, %v531
        %v533 = vrot.slane %v532, 1
        %v534 = vadd.f32 %v532, %v533
        %v535 = vadd.f32 %v523, %v526
        %v536 = vrot.slane %v535, 4
        %v537 = vadd.f32 %v535, %v536
        %v538 = vrot.slane %v537, 2
        %v539 = vadd.f32 %v537, %v538
        %v540 = vrot.slane %v539, 1
        %v541 = vadd.f32 %v539, %v540
        %v542 = vrcp.pop 16.0
        %v543 = vmul.f32 16.0, %v542
        %v544 = vsub.f32 1.0, %v543
        %v545 = vmul.f32 %v542, %v544
        %v546 = vadd.f32 %v542, %v545
        %vm547 = vweird.f32 %v542
        %v548 = vsel %vm547, %v542, %v546
        %v549 = vmul.f32 %v534, %v548
        %v550 = vmul.f32 %v541, %v548
        %v551 = vsub.f32 %v500, %v549
        %v552 = vsub.f32 %v523, %v550
        %v553 = vsub.f32 %v503, %v549
        %v554 = vsub.f32 %v526, %v550
        %v555 = vmul.f32 %v551, %v551
        %v556 = vmul.f32 %v552, %v552
        %v557 = vmul.f32 %v553, %v553
        %v558 = vmul.f32 %v554, %v554
        %v559 = vadd.f32 %v555, %v557
        %v560 = vrot.slane %v559, 4
        %v561 = vadd.f32 %v559, %v560
        %v562 = vrot.slane %v561, 2
        %v563 = vadd.f32 %v561, %v562
        %v564 = vrot.slane %v563, 1
        %v565 = vadd.f32 %v563, %v564
        %v566 = vadd.f32 %v556, %v558
        %v567 = vrot.slane %v566, 4
        %v568 = vadd.f32 %v566, %v567
        %v569 = vrot.slane %v568, 2
        %v570 = vadd.f32 %v568, %v569
        %v571 = vrot.slane %v570, 1
        %v572 = vadd.f32 %v570, %v571
        %v573 = vmul.f32 %v565, %v548
        %v574 = vmul.f32 %v572, %v548
        %v575 = vadd.f32 %v573, 1e-05
        %v576 = vadd.f32 %v574, 1e-05
        %v577 = vrsqrt.pop %v575
        %v578 = vmul.f32 %v577, %v575
        %v579 = vmul.f32 %v578, %v577
        %v580 = vmul.f32 0.5, %v579
        %v581 = vsub.f32 1.5, %v580
        %v582 = vmul.f32 %v577, %v581
        %vm583 = vweird.f32 %v575
        %vm584 = vweird.f32 %v577
        %vm585 = vmor %vm583, %vm584
        %v586 = vsel %vm585, %v577, %v582
        %v587 = vrsqrt.pop %v576
        %v588 = vmul.f32 %v587, %v576
        %v589 = vmul.f32 %v588, %v587
        %v590 = vmul.f32 0.5, %v589
        %v591 = vsub.f32 1.5, %v590
        %v592 = vmul.f32 %v587, %v591
        %vm593 = vweird.f32 %v576
        %vm594 = vweird.f32 %v587
        %vm595 = vmor %vm593, %vm594
        %v596 = vsel %vm595, %v587, %v592
        %v597 = vmul.f32 %v551, %v586
        %v598 = vmul.f32 %v552, %v596
        %v599 = vmul.f32 %v553, %v586
        %v600 = vmul.f32 %v554, %v596
        %601 = vset.pattern.permute.xlu0 1
        %602 = vperm.xlu0 %601, %v433
        %v603 = vpop.permute.xlu0 %602
        %605 = vset.pattern.permute.xlu0 1
        %606 = vperm.xlu0 %605, %v434
        %v607 = vpop.permute.xlu0 %606
        %v609 = vmul.f32 %v597, %v603
        %v610 = vmul.f32 %v598, %v603
        %v611 = vmul.f32 %v599, %v607
        %v612 = vmul.f32 %v600, %v607
        %613 = vset.pattern.permute.xlu0 2
        %614 = vperm.xlu0 %613, %v433
        %v615 = vpop.permute.xlu0 %614
        %617 = vset.pattern.permute.xlu0 2
        %618 = vperm.xlu0 %617, %v434
        %v619 = vpop.permute.xlu0 %618
        %v621 = vadd.f32 %v609, %v615
        %v622 = vadd.f32 %v610, %v615
        %v623 = vadd.f32 %v611, %v619
        %v624 = vadd.f32 %v612, %v619
        %v625 = vmul.f32 %v621, 0.5
        %v626 = vmul.f32 %v622, 0.5
        %v627 = vmul.f32 %v623, 0.5
        %v628 = vmul.f32 %v624, 0.5
        %v629 = vmul.f32 %v621, 0.70710677
        %v630 = vmul.f32 %v622, 0.70710677
        %v631 = vmul.f32 %v623, 0.70710677
        %v632 = vmul.f32 %v624, 0.70710677
        %v633 = vmul.f32 %v629, %v629
        %v634 = vmin.f32 16.0, %v633
        %v635 = vmul.f32 %v634, 2.1237322e-06
        %v636 = vadd.f32 %v635, 0.00028619796
        %v637 = vmul.f32 %v634, %v636
        %v638 = vadd.f32 %v637, 0.0036580483
        %v639 = vmul.f32 %v634, %v638
        %v640 = vadd.f32 %v639, 0.05243302
        %v641 = vmul.f32 %v634, %v640
        %v642 = vadd.f32 %v641, 0.18741608
        %v643 = vmul.f32 %v634, %v642
        %v644 = vadd.f32 %v643, 1.1283791
        %v645 = vmul.f32 %v629, %v644
        %v646 = vmul.f32 %v634, 3.8918573e-05
        %v647 = vadd.f32 %v646, 0.001143296
        %v648 = vmul.f32 %v634, %v647
        %v649 = vadd.f32 %v648, 0.014752088
        %v650 = vmul.f32 %v634, %v649
        %v651 = vadd.f32 %v650, 0.112945676
        %v652 = vmul.f32 %v634, %v651
        %v653 = vadd.f32 %v652, 0.4994258
        %v654 = vmul.f32 %v634, %v653
        %v655 = vadd.f32 %v654, 1.0
        %v656 = vrcp.pop %v655
        %v657 = vmul.f32 %v655, %v656
        %v658 = vsub.f32 1.0, %v657
        %v659 = vmul.f32 %v656, %v658
        %v660 = vadd.f32 %v656, %v659
        %vm661 = vweird.f32 %v655
        %vm662 = vweird.f32 %v656
        %vm663 = vmor %vm661, %vm662
        %v664 = vsel %vm663, %v656, %v660
        %v665 = vand.u32 2147483647, %v655
        %vm666 = vcmp.eq.f32.partialorder %v665, 8.507059e+37
        %v667 = vand.u32 %v655, 2147483648
        %v668 = vor.u32 1.1754944e-38, %v667
        %v669 = vsel %vm666, %v668, %v664
        %v670 = vmul.f32 %v645, %v669
        %v671 = vmin.f32 %v670, 1.0
        %v672 = vmax.f32 %v671, -1.0
        %v673 = vmul.f32 %v630, %v630
        %v674 = vmin.f32 16.0, %v673
        %v675 = vmul.f32 %v674, 2.1237322e-06
        %v676 = vadd.f32 %v675, 0.00028619796
        %v677 = vmul.f32 %v674, %v676
        %v678 = vadd.f32 %v677, 0.0036580483
        %v679 = vmul.f32 %v674, %v678
        %v680 = vadd.f32 %v679, 0.05243302
        %v681 = vmul.f32 %v674, %v680
        %v682 = vadd.f32 %v681, 0.18741608
        %v683 = vmul.f32 %v674, %v682
        %v684 = vadd.f32 %v683, 1.1283791
        %v685 = vmul.f32 %v630, %v684
        %v686 = vmul.f32 %v674, 3.8918573e-05
        %v687 = vadd.f32 %v686, 0.001143296
        %v688 = vmul.f32 %v674, %v687
        %v689 = vadd.f32 %v688, 0.014752088
        %v690 = vmul.f32 %v674, %v689
        %v691 = vadd.f32 %v690, 0.112945676
        %v692 = vmul.f32 %v674, %v691
        %v693 = vadd.f32 %v692, 0.4994258
        %v694 = vmul.f32 %v674, %v693
        %v695 = vadd.f32 %v694, 1.0
        %v696 = vrcp.pop %v695
        %v697 = vmul.f32 %v695, %v696
        %v698 = vsub.f32 1.0, %v697
        %v699 = vmul.f32 %v696, %v698
        %v700 = vadd.f32 %v696, %v699
        %vm701 = vweird.f32 %v695
        %vm702 = vweird.f32 %v696
        %vm703 = vmor %vm701, %vm702
        %v704 = vsel %vm703, %v696, %v700
        %v705 = vand.u32 2147483647, %v695
        %vm706 = vcmp.eq.f32.partialorder %v705, 8.507059e+37
        %v707 = vand.u32 %v695, 2147483648
        %v708 = vor.u32 1.1754944e-38, %v707
        %v709 = vsel %vm706, %v708, %v704
        %v710 = vmul.f32 %v685, %v709
        %v711 = vmin.f32 %v710, 1.0
        %v712 = vmax.f32 %v711, -1.0
        %v713 = vmul.f32 %v631, %v631
        %v714 = vmin.f32 16.0, %v713
        %v715 = vmul.f32 %v714, 2.1237322e-06
        %v716 = vadd.f32 %v715, 0.00028619796
        %v717 = vmul.f32 %v714, %v716
        %v718 = vadd.f32 %v717, 0.0036580483
        %v719 = vmul.f32 %v714, %v718
        %v720 = vadd.f32 %v719, 0.05243302
        %v721 = vmul.f32 %v714, %v720
        %v722 = vadd.f32 %v721, 0.18741608
        %v723 = vmul.f32 %v714, %v722
        %v724 = vadd.f32 %v723, 1.1283791
        %v725 = vmul.f32 %v631, %v724
        %v726 = vmul.f32 %v714, 3.8918573e-05
        %v727 = vadd.f32 %v726, 0.001143296
        %v728 = vmul.f32 %v714, %v727
        %v729 = vadd.f32 %v728, 0.014752088
        %v730 = vmul.f32 %v714, %v729
        %v731 = vadd.f32 %v730, 0.112945676
        %v732 = vmul.f32 %v714, %v731
        %v733 = vadd.f32 %v732, 0.4994258
        %v734 = vmul.f32 %v714, %v733
        %v735 = vadd.f32 %v734, 1.0
        %v736 = vrcp.pop %v735
        %v737 = vmul.f32 %v735, %v736
        %v738 = vsub.f32 1.0, %v737
        %v739 = vmul.f32 %v736, %v738
        %v740 = vadd.f32 %v736, %v739
        %vm741 = vweird.f32 %v735
        %vm742 = vweird.f32 %v736
        %vm743 = vmor %vm741, %vm742
        %v744 = vsel %vm743, %v736, %v740
        %v745 = vand.u32 2147483647, %v735
        %vm746 = vcmp.eq.f32.partialorder %v745, 8.507059e+37
        %v747 = vand.u32 %v735, 2147483648
        %v748 = vor.u32 1.1754944e-38, %v747
        %v749 = vsel %vm746, %v748, %v744
        %v750 = vmul.f32 %v725, %v749
        %v751 = vmin.f32 %v750, 1.0
        %v752 = vmax.f32 %v751, -1.0
        %v753 = vmul.f32 %v632, %v632
        %v754 = vmin.f32 16.0, %v753
        %v755 = vmul.f32 %v754, 2.1237322e-06
        %v756 = vadd.f32 %v755, 0.00028619796
        %v757 = vmul.f32 %v754, %v756
        %v758 = vadd.f32 %v757, 0.0036580483
        %v759 = vmul.f32 %v754, %v758
        %v760 = vadd.f32 %v759, 0.05243302
        %v761 = vmul.f32 %v754, %v760
        %v762 = vadd.f32 %v761, 0.18741608
        %v763 = vmul.f32 %v754, %v762
        %v764 = vadd.f32 %v763, 1.1283791
        %v765 = vmul.f32 %v632, %v764
        %v766 = vmul.f32 %v754, 3.8918573e-05
        %v767 = vadd.f32 %v766, 0.001143296
        %v768 = vmul.f32 %v754, %v767
        %v769 = vadd.f32 %v768, 0.014752088
        %v770 = vmul.f32 %v754, %v769
        %v771 = vadd.f32 %v770, 0.112945676
        %v772 = vmul.f32 %v754, %v771
        %v773 = vadd.f32 %v772, 0.4994258
        %v774 = vmul.f32 %v754, %v773
        %v775 = vadd.f32 %v774, 1.0
        %v776 = vrcp.pop %v775
        %v777 = vmul.f32 %v775, %v776
        %v778 = vsub.f32 1.0, %v777
        %v779 = vmul.f32 %v776, %v778
        %v780 = vadd.f32 %v776, %v779
        %vm781 = vweird.f32 %v775
        %vm782 = vweird.f32 %v776
        %vm783 = vmor %vm781, %vm782
        %v784 = vsel %vm783, %v776, %v780
        %v785 = vand.u32 2147483647, %v775
        %vm786 = vcmp.eq.f32.partialorder %v785, 8.507059e+37
        %v787 = vand.u32 %v775, 2147483648
        %v788 = vor.u32 1.1754944e-38, %v787
        %v789 = vsel %vm786, %v788, %v784
        %v790 = vmul.f32 %v765, %v789
        %v791 = vmin.f32 %v790, 1.0
        %v792 = vmax.f32 %v791, -1.0
        %v793 = vadd.f32 %v672, 1.0
        %v794 = vadd.f32 %v712, 1.0
        %v795 = vadd.f32 %v752, 1.0
        %v796 = vadd.f32 %v792, 1.0
        %v797 = vmul.f32 %v625, %v793
        %v798 = vmul.f32 %v626, %v794
        %v799 = vmul.f32 %v627, %v795
        %v800 = vmul.f32 %v628, %v796
        %v801 = vld [vmem:[%s3] sm:$0xff]
        %v802 = vld [vmem:[%s3 + $0x8] sm:$0xff]
        %v803 = vld [vmem:[%s3 + $0x10] sm:$0xff]
        %v804 = vld [vmem:[%s3 + $0x18] sm:$0xff]
        %806 = vset.pattern.permute.xlu0 0
        %807 = vperm.xlu0 %806, %v435
        %v808 = vpop.permute.xlu0 %807
        %811 = vset.pattern.permute.xlu0 0
        %812 = vperm.xlu0 %811, %v436
        %v813 = vpop.permute.xlu0 %812
        %816 = vset.pattern.permute.xlu0 0
        %817 = vperm.xlu0 %816, %v437
        %v818 = vpop.permute.xlu0 %817
        %821 = vset.pattern.permute.xlu0 0
        %822 = vperm.xlu0 %821, %v438
        %v823 = vpop.permute.xlu0 %822
        %vm825 = vcmask 130048
        %v827 = vsel %vm825, %v801, 0
        %v830 = vsel %vm825, %v802, 0
        %v833 = vsel %vm825, %v803, 0
        %v836 = vsel %vm825, %v804, 0
        %838 = vmatpush.msra.mxu0 0.0
        %839 = vmatpush.msra.mxu0 0.0
        %840 = vmatpush.msra.mxu0 0.0
        %841 = vmatpush.msra.mxu0 0.0
        %842 = vmatpush.msra.mxu0 0.0
        %843 = vmatpush.msra.mxu0 0.0
        %844 = vmatpush.msra.mxu0 0.0
        %845 = vmatpush.msra.mxu0 0.0
        %846 = vmatpush.msra.mxu0 0.0
        %847 = vmatpush.msra.mxu0 0.0
        %848 = vmatpush.msra.mxu0 0.0
        %849 = vmatpush.msra.mxu0 0.0
        %850 = vmatpush.msra.mxu0 0.0
        %851 = vmatpush.msra.mxu0 0.0
        %852 = vmatpush.msra.mxu0 %v799
        %853 = vmatpush.msra.mxu0 %v797
        %854 = vmatmul.f32.gmra.mxu0 %v827
        %v855 = vpop.f32.mrf.mxu0
        %v856 = vadd.f32 %v808, %v855
        %857 = vmatmul.f32.gmra.mxu0 %v830
        %v858 = vpop.f32.mrf.mxu0
        %v859 = vadd.f32 %v813, %v858
        %860 = vmatmul.f32.gmra.mxu0 %v833
        %v861 = vpop.f32.mrf.mxu0
        %v862 = vadd.f32 %v818, %v861
        %863 = vmatmul.f32.gmra.mxu0 %v836
        %v864 = vpop.f32.mrf.mxu0
        %v865 = vadd.f32 %v823, %v864
        %866 = vdwg.mxu0
        %867 = vmatpush.msra.mxu0 0.0
        %868 = vmatpush.msra.mxu0 0.0
        %869 = vmatpush.msra.mxu0 0.0
        %870 = vmatpush.msra.mxu0 0.0
        %871 = vmatpush.msra.mxu0 0.0
        %872 = vmatpush.msra.mxu0 0.0
        %873 = vmatpush.msra.mxu0 0.0
        %874 = vmatpush.msra.mxu0 0.0
        %875 = vmatpush.msra.mxu0 0.0
        %876 = vmatpush.msra.mxu0 0.0
        %877 = vmatpush.msra.mxu0 0.0
        %878 = vmatpush.msra.mxu0 0.0
        %879 = vmatpush.msra.mxu0 0.0
        %880 = vmatpush.msra.mxu0 0.0
        %881 = vmatpush.msra.mxu0 %v800
        %882 = vmatpush.msra.mxu0 %v798
        %883 = vmatmul.f32.gmra.mxu0 %v827
        %v884 = vpop.f32.mrf.mxu0
        %v885 = vadd.f32 %v808, %v884
        %886 = vmatmul.f32.gmra.mxu0 %v830
        %v887 = vpop.f32.mrf.mxu0
        %v888 = vadd.f32 %v813, %v887
        %889 = vmatmul.f32.gmra.mxu0 %v833
        %v890 = vpop.f32.mrf.mxu0
        %v891 = vadd.f32 %v818, %v890
        %892 = vmatmul.f32.gmra.mxu0 %v836
        %v893 = vpop.f32.mrf.mxu0
        %v894 = vadd.f32 %v823, %v893
        %895 = vdwg.mxu0
        %v896 = vadd.f32 %v856, %v859
        %v897 = vadd.f32 %v896, %v862
        %v898 = vadd.f32 %v897, %v865
        %v899 = vrot.slane %v898, 4
        %v900 = vadd.f32 %v898, %v899
        %v901 = vrot.slane %v900, 2
        %v902 = vadd.f32 %v900, %v901
        %v903 = vrot.slane %v902, 1
        %v904 = vadd.f32 %v902, %v903
        %v905 = vadd.f32 %v885, %v888
        %v906 = vadd.f32 %v905, %v891
        %v907 = vadd.f32 %v906, %v894
        %v908 = vrot.slane %v907, 4
        %v909 = vadd.f32 %v907, %v908
        %v910 = vrot.slane %v909, 2
        %v911 = vadd.f32 %v909, %v910
        %v912 = vrot.slane %v911, 1
        %v913 = vadd.f32 %v911, %v912
        %v914 = vrcp.pop 32.0
        %v915 = vmul.f32 32.0, %v914
        %v916 = vsub.f32 1.0, %v915
        %v917 = vmul.f32 %v914, %v916
        %v918 = vadd.f32 %v914, %v917
        %vm919 = vweird.f32 %v914
        %v920 = vsel %vm919, %v914, %v918
        %v921 = vmul.f32 %v904, %v920
        %v922 = vmul.f32 %v913, %v920
        %v923 = vsub.f32 %v856, %v921
        %v924 = vsub.f32 %v885, %v922
        %v925 = vsub.f32 %v859, %v921
        %v926 = vsub.f32 %v888, %v922
        %v927 = vsub.f32 %v862, %v921
        %v928 = vsub.f32 %v891, %v922
        %v929 = vsub.f32 %v865, %v921
        %v930 = vsub.f32 %v894, %v922
        %v931 = vmul.f32 %v923, %v923
        %v932 = vmul.f32 %v924, %v924
        %v933 = vmul.f32 %v925, %v925
        %v934 = vmul.f32 %v926, %v926
        %v935 = vmul.f32 %v927, %v927
        %v936 = vmul.f32 %v928, %v928
        %v937 = vmul.f32 %v929, %v929
        %v938 = vmul.f32 %v930, %v930
        %v939 = vadd.f32 %v931, %v933
        %v940 = vadd.f32 %v939, %v935
        %v941 = vadd.f32 %v940, %v937
        %v942 = vrot.slane %v941, 4
        %v943 = vadd.f32 %v941, %v942
        %v944 = vrot.slane %v943, 2
        %v945 = vadd.f32 %v943, %v944
        %v946 = vrot.slane %v945, 1
        %v947 = vadd.f32 %v945, %v946
        %v948 = vadd.f32 %v932, %v934
        %v949 = vadd.f32 %v948, %v936
        %v950 = vadd.f32 %v949, %v938
        %v951 = vrot.slane %v950, 4
        %v952 = vadd.f32 %v950, %v951
        %v953 = vrot.slane %v952, 2
        %v954 = vadd.f32 %v952, %v953
        %v955 = vrot.slane %v954, 1
        %v956 = vadd.f32 %v954, %v955
        %v957 = vmul.f32 %v947, %v920
        %v958 = vmul.f32 %v956, %v920
        %v959 = vadd.f32 %v957, 1e-05
        %v960 = vadd.f32 %v958, 1e-05
        %v961 = vrsqrt.pop %v959
        %v962 = vmul.f32 %v961, %v959
        %v963 = vmul.f32 %v962, %v961
        %v964 = vmul.f32 0.5, %v963
        %v965 = vsub.f32 1.5, %v964
        %v966 = vmul.f32 %v961, %v965
        %vm967 = vweird.f32 %v959
        %vm968 = vweird.f32 %v961
        %vm969 = vmor %vm967, %vm968
        %v970 = vsel %vm969, %v961, %v966
        %v971 = vrsqrt.pop %v960
        %v972 = vmul.f32 %v971, %v960
        %v973 = vmul.f32 %v972, %v971
        %v974 = vmul.f32 0.5, %v973
        %v975 = vsub.f32 1.5, %v974
        %v976 = vmul.f32 %v971, %v975
        %vm977 = vweird.f32 %v960
        %vm978 = vweird.f32 %v971
        %vm979 = vmor %vm977, %vm978
        %v980 = vsel %vm979, %v971, %v976
        %v981 = vmul.f32 %v923, %v970
        %v982 = vmul.f32 %v924, %v980
        %v983 = vmul.f32 %v925, %v970
        %v984 = vmul.f32 %v926, %v980
        %v985 = vmul.f32 %v927, %v970
        %v986 = vmul.f32 %v928, %v980
        %v987 = vmul.f32 %v929, %v970
        %v988 = vmul.f32 %v930, %v980
        %989 = vset.pattern.permute.xlu0 1
        %990 = vperm.xlu0 %989, %v435
        %v991 = vpop.permute.xlu0 %990
        %993 = vset.pattern.permute.xlu0 1
        %994 = vperm.xlu0 %993, %v436
        %v995 = vpop.permute.xlu0 %994
        %997 = vset.pattern.permute.xlu0 1
        %998 = vperm.xlu0 %997, %v437
        %v999 = vpop.permute.xlu0 %998
        %1001 = vset.pattern.permute.xlu0 1
        %1002 = vperm.xlu0 %1001, %v438
        %v1003 = vpop.permute.xlu0 %1002
        %v1005 = vmul.f32 %v981, %v991
        %v1006 = vmul.f32 %v982, %v991
        %v1007 = vmul.f32 %v983, %v995
        %v1008 = vmul.f32 %v984, %v995
        %v1009 = vmul.f32 %v985, %v999
        %v1010 = vmul.f32 %v986, %v999
        %v1011 = vmul.f32 %v987, %v1003
        %v1012 = vmul.f32 %v988, %v1003
        %1013 = vset.pattern.permute.xlu0 2
        %1014 = vperm.xlu0 %1013, %v435
        %v1015 = vpop.permute.xlu0 %1014
        %1017 = vset.pattern.permute.xlu0 2
        %1018 = vperm.xlu0 %1017, %v436
        %v1019 = vpop.permute.xlu0 %1018
        %1021 = vset.pattern.permute.xlu0 2
        %1022 = vperm.xlu0 %1021, %v437
        %v1023 = vpop.permute.xlu0 %1022
        %1025 = vset.pattern.permute.xlu0 2
        %1026 = vperm.xlu0 %1025, %v438
        %v1027 = vpop.permute.xlu0 %1026
        %v1029 = vadd.f32 %v1005, %v1015
        %v1030 = vadd.f32 %v1006, %v1015
        %v1031 = vadd.f32 %v1007, %v1019
        %v1032 = vadd.f32 %v1008, %v1019
        %v1033 = vadd.f32 %v1009, %v1023
        %v1034 = vadd.f32 %v1010, %v1023
        %v1035 = vadd.f32 %v1011, %v1027
        %v1036 = vadd.f32 %v1012, %v1027
        %v1037 = vmul.f32 %v1029, 0.5
        %v1038 = vmul.f32 %v1030, 0.5
        %v1039 = vmul.f32 %v1031, 0.5
        %v1040 = vmul.f32 %v1032, 0.5
        %v1041 = vmul.f32 %v1033, 0.5
        %v1042 = vmul.f32 %v1034, 0.5
        %v1043 = vmul.f32 %v1035, 0.5
        %v1044 = vmul.f32 %v1036, 0.5
        %v1045 = vmul.f32 %v1029, 0.70710677
        %v1046 = vmul.f32 %v1030, 0.70710677
        %v1047 = vmul.f32 %v1031, 0.70710677
        %v1048 = vmul.f32 %v1032, 0.70710677
        %v1049 = vmul.f32 %v1033, 0.70710677
        %v1050 = vmul.f32 %v1034, 0.70710677
        %v1051 = vmul.f32 %v1035, 0.70710677
        %v1052 = vmul.f32 %v1036, 0.70710677
        %v1053 = vmul.f32 %v1045, %v1045
        %v1054 = vmin.f32 16.0, %v1053
        %v1055 = vmul.f32 %v1054, 2.1237322e-06
        %v1056 = vadd.f32 %v1055, 0.00028619796
        %v1057 = vmul.f32 %v1054, %v1056
        %v1058 = vadd.f32 %v1057, 0.0036580483
        %v1059 = vmul.f32 %v1054, %v1058
        %v1060 = vadd.f32 %v1059, 0.05243302
        %v1061 = vmul.f32 %v1054, %v1060
        %v1062 = vadd.f32 %v1061, 0.18741608
        %v1063 = vmul.f32 %v1054, %v1062
        %v1064 = vadd.f32 %v1063, 1.1283791
        %v1065 = vmul.f32 %v1045, %v1064
        %v1066 = vmul.f32 %v1054, 3.8918573e-05
        %v1067 = vadd.f32 %v1066, 0.001143296
        %v1068 = vmul.f32 %v1054, %v1067
        %v1069 = vadd.f32 %v1068, 0.014752088
        %v1070 = vmul.f32 %v1054, %v1069
        %v1071 = vadd.f32 %v1070, 0.112945676
        %v1072 = vmul.f32 %v1054, %v1071
        %v1073 = vadd.f32 %v1072, 0.4994258
        %v1074 = vmul.f32 %v1054, %v1073
        %v1075 = vadd.f32 %v1074, 1.0
        %v1076 = vrcp.pop %v1075
        %v1077 = vmul.f32 %v1075, %v1076
        %v1078 = vsub.f32 1.0, %v1077
        %v1079 = vmul.f32 %v1076, %v1078
        %v1080 = vadd.f32 %v1076, %v1079
        %vm1081 = vweird.f32 %v1075
        %vm1082 = vweird.f32 %v1076
        %vm1083 = vmor %vm1081, %vm1082
        %v1084 = vsel %vm1083, %v1076, %v1080
        %v1085 = vand.u32 2147483647, %v1075
        %vm1086 = vcmp.eq.f32.partialorder %v1085, 8.507059e+37
        %v1087 = vand.u32 %v1075, 2147483648
        %v1088 = vor.u32 1.1754944e-38, %v1087
        %v1089 = vsel %vm1086, %v1088, %v1084
        %v1090 = vmul.f32 %v1065, %v1089
        %v1091 = vmin.f32 %v1090, 1.0
        %v1092 = vmax.f32 %v1091, -1.0
        %v1093 = vmul.f32 %v1046, %v1046
        %v1094 = vmin.f32 16.0, %v1093
        %v1095 = vmul.f32 %v1094, 2.1237322e-06
        %v1096 = vadd.f32 %v1095, 0.00028619796
        %v1097 = vmul.f32 %v1094, %v1096
        %v1098 = vadd.f32 %v1097, 0.0036580483
        %v1099 = vmul.f32 %v1094, %v1098
        %v1100 = vadd.f32 %v1099, 0.05243302
        %v1101 = vmul.f32 %v1094, %v1100
        %v1102 = vadd.f32 %v1101, 0.18741608
        %v1103 = vmul.f32 %v1094, %v1102
        %v1104 = vadd.f32 %v1103, 1.1283791
        %v1105 = vmul.f32 %v1046, %v1104
        %v1106 = vmul.f32 %v1094, 3.8918573e-05
        %v1107 = vadd.f32 %v1106, 0.001143296
        %v1108 = vmul.f32 %v1094, %v1107
        %v1109 = vadd.f32 %v1108, 0.014752088
        %v1110 = vmul.f32 %v1094, %v1109
        %v1111 = vadd.f32 %v1110, 0.112945676
        %v1112 = vmul.f32 %v1094, %v1111
        %v1113 = vadd.f32 %v1112, 0.4994258
        %v1114 = vmul.f32 %v1094, %v1113
        %v1115 = vadd.f32 %v1114, 1.0
        %v1116 = vrcp.pop %v1115
        %v1117 = vmul.f32 %v1115, %v1116
        %v1118 = vsub.f32 1.0, %v1117
        %v1119 = vmul.f32 %v1116, %v1118
        %v1120 = vadd.f32 %v1116, %v1119
        %vm1121 = vweird.f32 %v1115
        %vm1122 = vweird.f32 %v1116
        %vm1123 = vmor %vm1121, %vm1122
        %v1124 = vsel %vm1123, %v1116, %v1120
        %v1125 = vand.u32 2147483647, %v1115
        %vm1126 = vcmp.eq.f32.partialorder %v1125, 8.507059e+37
        %v1127 = vand.u32 %v1115, 2147483648
        %v1128 = vor.u32 1.1754944e-38, %v1127
        %v1129 = vsel %vm1126, %v1128, %v1124
        %v1130 = vmul.f32 %v1105, %v1129
        %v1131 = vmin.f32 %v1130, 1.0
        %v1132 = vmax.f32 %v1131, -1.0
        %v1133 = vmul.f32 %v1047, %v1047
        %v1134 = vmin.f32 16.0, %v1133
        %v1135 = vmul.f32 %v1134, 2.1237322e-06
        %v1136 = vadd.f32 %v1135, 0.00028619796
        %v1137 = vmul.f32 %v1134, %v1136
        %v1138 = vadd.f32 %v1137, 0.0036580483
        %v1139 = vmul.f32 %v1134, %v1138
        %v1140 = vadd.f32 %v1139, 0.05243302
        %v1141 = vmul.f32 %v1134, %v1140
        %v1142 = vadd.f32 %v1141, 0.18741608
        %v1143 = vmul.f32 %v1134, %v1142
        %v1144 = vadd.f32 %v1143, 1.1283791
        %v1145 = vmul.f32 %v1047, %v1144
        %v1146 = vmul.f32 %v1134, 3.8918573e-05
        %v1147 = vadd.f32 %v1146, 0.001143296
        %v1148 = vmul.f32 %v1134, %v1147
        %v1149 = vadd.f32 %v1148, 0.014752088
        %v1150 = vmul.f32 %v1134, %v1149
        %v1151 = vadd.f32 %v1150, 0.112945676
        %v1152 = vmul.f32 %v1134, %v1151
        %v1153 = vadd.f32 %v1152, 0.4994258
        %v1154 = vmul.f32 %v1134, %v1153
        %v1155 = vadd.f32 %v1154, 1.0
        %v1156 = vrcp.pop %v1155
        %v1157 = vmul.f32 %v1155, %v1156
        %v1158 = vsub.f32 1.0, %v1157
        %v1159 = vmul.f32 %v1156, %v1158
        %v1160 = vadd.f32 %v1156, %v1159
        %vm1161 = vweird.f32 %v1155
        %vm1162 = vweird.f32 %v1156
        %vm1163 = vmor %vm1161, %vm1162
        %v1164 = vsel %vm1163, %v1156, %v1160
        %v1165 = vand.u32 2147483647, %v1155
        %vm1166 = vcmp.eq.f32.partialorder %v1165, 8.507059e+37
        %v1167 = vand.u32 %v1155, 2147483648
        %v1168 = vor.u32 1.1754944e-38, %v1167
        %v1169 = vsel %vm1166, %v1168, %v1164
        %v1170 = vmul.f32 %v1145, %v1169
        %v1171 = vmin.f32 %v1170, 1.0
        %v1172 = vmax.f32 %v1171, -1.0
        %v1173 = vmul.f32 %v1048, %v1048
        %v1174 = vmin.f32 16.0, %v1173
        %v1175 = vmul.f32 %v1174, 2.1237322e-06
        %v1176 = vadd.f32 %v1175, 0.00028619796
        %v1177 = vmul.f32 %v1174, %v1176
        %v1178 = vadd.f32 %v1177, 0.0036580483
        %v1179 = vmul.f32 %v1174, %v1178
        %v1180 = vadd.f32 %v1179, 0.05243302
        %v1181 = vmul.f32 %v1174, %v1180
        %v1182 = vadd.f32 %v1181, 0.18741608
        %v1183 = vmul.f32 %v1174, %v1182
        %v1184 = vadd.f32 %v1183, 1.1283791
        %v1185 = vmul.f32 %v1048, %v1184
        %v1186 = vmul.f32 %v1174, 3.8918573e-05
        %v1187 = vadd.f32 %v1186, 0.001143296
        %v1188 = vmul.f32 %v1174, %v1187
        %v1189 = vadd.f32 %v1188, 0.014752088
        %v1190 = vmul.f32 %v1174, %v1189
        %v1191 = vadd.f32 %v1190, 0.112945676
        %v1192 = vmul.f32 %v1174, %v1191
        %v1193 = vadd.f32 %v1192, 0.4994258
        %v1194 = vmul.f32 %v1174, %v1193
        %v1195 = vadd.f32 %v1194, 1.0
        %v1196 = vrcp.pop %v1195
        %v1197 = vmul.f32 %v1195, %v1196
        %v1198 = vsub.f32 1.0, %v1197
        %v1199 = vmul.f32 %v1196, %v1198
        %v1200 = vadd.f32 %v1196, %v1199
        %vm1201 = vweird.f32 %v1195
        %vm1202 = vweird.f32 %v1196
        %vm1203 = vmor %vm1201, %vm1202
        %v1204 = vsel %vm1203, %v1196, %v1200
        %v1205 = vand.u32 2147483647, %v1195
        %vm1206 = vcmp.eq.f32.partialorder %v1205, 8.507059e+37
        %v1207 = vand.u32 %v1195, 2147483648
        %v1208 = vor.u32 1.1754944e-38, %v1207
        %v1209 = vsel %vm1206, %v1208, %v1204
        %v1210 = vmul.f32 %v1185, %v1209
        %v1211 = vmin.f32 %v1210, 1.0
        %v1212 = vmax.f32 %v1211, -1.0
        %v1213 = vmul.f32 %v1049, %v1049
        %v1214 = vmin.f32 16.0, %v1213
        %v1215 = vmul.f32 %v1214, 2.1237322e-06
        %v1216 = vadd.f32 %v1215, 0.00028619796
        %v1217 = vmul.f32 %v1214, %v1216
        %v1218 = vadd.f32 %v1217, 0.0036580483
        %v1219 = vmul.f32 %v1214, %v1218
        %v1220 = vadd.f32 %v1219, 0.05243302
        %v1221 = vmul.f32 %v1214, %v1220
        %v1222 = vadd.f32 %v1221, 0.18741608
        %v1223 = vmul.f32 %v1214, %v1222
        %v1224 = vadd.f32 %v1223, 1.1283791
        %v1225 = vmul.f32 %v1049, %v1224
        %v1226 = vmul.f32 %v1214, 3.8918573e-05
        %v1227 = vadd.f32 %v1226, 0.001143296
        %v1228 = vmul.f32 %v1214, %v1227
        %v1229 = vadd.f32 %v1228, 0.014752088
        %v1230 = vmul.f32 %v1214, %v1229
        %v1231 = vadd.f32 %v1230, 0.112945676
        %v1232 = vmul.f32 %v1214, %v1231
        %v1233 = vadd.f32 %v1232, 0.4994258
        %v1234 = vmul.f32 %v1214, %v1233
        %v1235 = vadd.f32 %v1234, 1.0
        %v1236 = vrcp.pop %v1235
        %v1237 = vmul.f32 %v1235, %v1236
        %v1238 = vsub.f32 1.0, %v1237
        %v1239 = vmul.f32 %v1236, %v1238
        %v1240 = vadd.f32 %v1236, %v1239
        %vm1241 = vweird.f32 %v1235
        %vm1242 = vweird.f32 %v1236
        %vm1243 = vmor %vm1241, %vm1242
        %v1244 = vsel %vm1243, %v1236, %v1240
        %v1245 = vand.u32 2147483647, %v1235
        %vm1246 = vcmp.eq.f32.partialorder %v1245, 8.507059e+37
        %v1247 = vand.u32 %v1235, 2147483648
        %v1248 = vor.u32 1.1754944e-38, %v1247
        %v1249 = vsel %vm1246, %v1248, %v1244
        %v1250 = vmul.f32 %v1225, %v1249
        %v1251 = vmin.f32 %v1250, 1.0
        %v1252 = vmax.f32 %v1251, -1.0
        %v1253 = vmul.f32 %v1050, %v1050
        %v1254 = vmin.f32 16.0, %v1253
        %v1255 = vmul.f32 %v1254, 2.1237322e-06
        %v1256 = vadd.f32 %v1255, 0.00028619796
        %v1257 = vmul.f32 %v1254, %v1256
        %v1258 = vadd.f32 %v1257, 0.0036580483
        %v1259 = vmul.f32 %v1254, %v1258
        %v1260 = vadd.f32 %v1259, 0.05243302
        %v1261 = vmul.f32 %v1254, %v1260
        %v1262 = vadd.f32 %v1261, 0.18741608
        %v1263 = vmul.f32 %v1254, %v1262
        %v1264 = vadd.f32 %v1263, 1.1283791
        %v1265 = vmul.f32 %v1050, %v1264
        %v1266 = vmul.f32 %v1254, 3.8918573e-05
        %v1267 = vadd.f32 %v1266, 0.001143296
        %v1268 = vmul.f32 %v1254, %v1267
        %v1269 = vadd.f32 %v1268, 0.014752088
        %v1270 = vmul.f32 %v1254, %v1269
        %v1271 = vadd.f32 %v1270, 0.112945676
        %v1272 = vmul.f32 %v1254, %v1271
        %v1273 = vadd.f32 %v1272, 0.4994258
        %v1274 = vmul.f32 %v1254, %v1273
        %v1275 = vadd.f32 %v1274, 1.0
        %v1276 = vrcp.pop %v1275
        %v1277 = vmul.f32 %v1275, %v1276
        %v1278 = vsub.f32 1.0, %v1277
        %v1279 = vmul.f32 %v1276, %v1278
        %v1280 = vadd.f32 %v1276, %v1279
        %vm1281 = vweird.f32 %v1275
        %vm1282 = vweird.f32 %v1276
        %vm1283 = vmor %vm1281, %vm1282
        %v1284 = vsel %vm1283, %v1276, %v1280
        %v1285 = vand.u32 2147483647, %v1275
        %vm1286 = vcmp.eq.f32.partialorder %v1285, 8.507059e+37
        %v1287 = vand.u32 %v1275, 2147483648
        %v1288 = vor.u32 1.1754944e-38, %v1287
        %v1289 = vsel %vm1286, %v1288, %v1284
        %v1290 = vmul.f32 %v1265, %v1289
        %v1291 = vmin.f32 %v1290, 1.0
        %v1292 = vmax.f32 %v1291, -1.0
        %v1293 = vmul.f32 %v1051, %v1051
        %v1294 = vmin.f32 16.0, %v1293
        %v1295 = vmul.f32 %v1294, 2.1237322e-06
        %v1296 = vadd.f32 %v1295, 0.00028619796
        %v1297 = vmul.f32 %v1294, %v1296
        %v1298 = vadd.f32 %v1297, 0.0036580483
        %v1299 = vmul.f32 %v1294, %v1298
        %v1300 = vadd.f32 %v1299, 0.05243302
        %v1301 = vmul.f32 %v1294, %v1300
        %v1302 = vadd.f32 %v1301, 0.18741608
        %v1303 = vmul.f32 %v1294, %v1302
        %v1304 = vadd.f32 %v1303, 1.1283791
        %v1305 = vmul.f32 %v1051, %v1304
        %v1306 = vmul.f32 %v1294, 3.8918573e-05
        %v1307 = vadd.f32 %v1306, 0.001143296
        %v1308 = vmul.f32 %v1294, %v1307
        %v1309 = vadd.f32 %v1308, 0.014752088
        %v1310 = vmul.f32 %v1294, %v1309
        %v1311 = vadd.f32 %v1310, 0.112945676
        %v1312 = vmul.f32 %v1294, %v1311
        %v1313 = vadd.f32 %v1312, 0.4994258
        %v1314 = vmul.f32 %v1294, %v1313
        %v1315 = vadd.f32 %v1314, 1.0
        %v1316 = vrcp.pop %v1315
        %v1317 = vmul.f32 %v1315, %v1316
        %v1318 = vsub.f32 1.0, %v1317
        %v1319 = vmul.f32 %v1316, %v1318
        %v1320 = vadd.f32 %v1316, %v1319
        %vm1321 = vweird.f32 %v1315
        %vm1322 = vweird.f32 %v1316
        %vm1323 = vmor %vm1321, %vm1322
        %v1324 = vsel %vm1323, %v1316, %v1320
        %v1325 = vand.u32 2147483647, %v1315
        %vm1326 = vcmp.eq.f32.partialorder %v1325, 8.507059e+37
        %v1327 = vand.u32 %v1315, 2147483648
        %v1328 = vor.u32 1.1754944e-38, %v1327
        %v1329 = vsel %vm1326, %v1328, %v1324
        %v1330 = vmul.f32 %v1305, %v1329
        %v1331 = vmin.f32 %v1330, 1.0
        %v1332 = vmax.f32 %v1331, -1.0
        %v1333 = vmul.f32 %v1052, %v1052
        %v1334 = vmin.f32 16.0, %v1333
        %v1335 = vmul.f32 %v1334, 2.1237322e-06
        %v1336 = vadd.f32 %v1335, 0.00028619796
        %v1337 = vmul.f32 %v1334, %v1336
        %v1338 = vadd.f32 %v1337, 0.0036580483
        %v1339 = vmul.f32 %v1334, %v1338
        %v1340 = vadd.f32 %v1339, 0.05243302
        %v1341 = vmul.f32 %v1334, %v1340
        %v1342 = vadd.f32 %v1341, 0.18741608
        %v1343 = vmul.f32 %v1334, %v1342
        %v1344 = vadd.f32 %v1343, 1.1283791
        %v1345 = vmul.f32 %v1052, %v1344
        %v1346 = vmul.f32 %v1334, 3.8918573e-05
        %v1347 = vadd.f32 %v1346, 0.001143296
        %v1348 = vmul.f32 %v1334, %v1347
        %v1349 = vadd.f32 %v1348, 0.014752088
        %v1350 = vmul.f32 %v1334, %v1349
        %v1351 = vadd.f32 %v1350, 0.112945676
        %v1352 = vmul.f32 %v1334, %v1351
        %v1353 = vadd.f32 %v1352, 0.4994258
        %v1354 = vmul.f32 %v1334, %v1353
        %v1355 = vadd.f32 %v1354, 1.0
        %v1356 = vrcp.pop %v1355
        %v1357 = vmul.f32 %v1355, %v1356
        %v1358 = vsub.f32 1.0, %v1357
        %v1359 = vmul.f32 %v1356, %v1358
        %v1360 = vadd.f32 %v1356, %v1359
        %vm1361 = vweird.f32 %v1355
        %vm1362 = vweird.f32 %v1356
        %vm1363 = vmor %vm1361, %vm1362
        %v1364 = vsel %vm1363, %v1356, %v1360
        %v1365 = vand.u32 2147483647, %v1355
        %vm1366 = vcmp.eq.f32.partialorder %v1365, 8.507059e+37
        %v1367 = vand.u32 %v1355, 2147483648
        %v1368 = vor.u32 1.1754944e-38, %v1367
        %v1369 = vsel %vm1366, %v1368, %v1364
        %v1370 = vmul.f32 %v1345, %v1369
        %v1371 = vmin.f32 %v1370, 1.0
        %v1372 = vmax.f32 %v1371, -1.0
        %v1373 = vadd.f32 %v1092, 1.0
        %v1374 = vadd.f32 %v1132, 1.0
        %v1375 = vadd.f32 %v1172, 1.0
        %v1376 = vadd.f32 %v1212, 1.0
        %v1377 = vadd.f32 %v1252, 1.0
        %v1378 = vadd.f32 %v1292, 1.0
        %v1379 = vadd.f32 %v1332, 1.0
        %v1380 = vadd.f32 %v1372, 1.0
        %v1381 = vmul.f32 %v1037, %v1373
        %v1382 = vmul.f32 %v1038, %v1374
        %v1383 = vmul.f32 %v1039, %v1375
        %v1384 = vmul.f32 %v1040, %v1376
        %v1385 = vmul.f32 %v1041, %v1377
        %v1386 = vmul.f32 %v1042, %v1378
        %v1387 = vmul.f32 %v1043, %v1379
        %v1388 = vmul.f32 %v1044, %v1380
        %v1389 = vld [vmem:[%s5] sm:$0xff]
        %v1390 = vld [vmem:[%s5 + $0x8] sm:$0xff]
        %v1391 = vld [vmem:[%s5 + $0x10] sm:$0xff]
        %v1392 = vld [vmem:[%s5 + $0x18] sm:$0xff]
        %1394 = vset.pattern.permute.xlu0 0
        %1395 = vperm.xlu0 %1394, %v439
        %v1396 = vpop.permute.xlu0 %1395
        %1399 = vset.pattern.permute.xlu0 0
        %1400 = vperm.xlu0 %1399, %v440
        %v1401 = vpop.permute.xlu0 %1400
        %1404 = vset.pattern.permute.xlu0 0
        %1405 = vperm.xlu0 %1404, %v441
        %v1406 = vpop.permute.xlu0 %1405
        %1409 = vset.pattern.permute.xlu0 0
        %1410 = vperm.xlu0 %1409, %v442
        %v1411 = vpop.permute.xlu0 %1410
        %vm1413 = vcmask 261120
        %v1415 = vsel %vm1413, %v1389, 0
        %v1418 = vsel %vm1413, %v1390, 0
        %v1421 = vsel %vm1413, %v1391, 0
        %v1424 = vsel %vm1413, %v1392, 0
        %1426 = vmatpush.msra.mxu0 0.0
        %1427 = vmatpush.msra.mxu0 0.0
        %1428 = vmatpush.msra.mxu0 0.0
        %1429 = vmatpush.msra.mxu0 0.0
        %1430 = vmatpush.msra.mxu0 0.0
        %1431 = vmatpush.msra.mxu0 0.0
        %1432 = vmatpush.msra.mxu0 0.0
        %1433 = vmatpush.msra.mxu0 0.0
        %1434 = vmatpush.msra.mxu0 0.0
        %1435 = vmatpush.msra.mxu0 0.0
        %1436 = vmatpush.msra.mxu0 0.0
        %1437 = vmatpush.msra.mxu0 0.0
        %1438 = vmatpush.msra.mxu0 %v1387
        %1439 = vmatpush.msra.mxu0 %v1385
        %1440 = vmatpush.msra.mxu0 %v1383
        %1441 = vmatpush.msra.mxu0 %v1381
        %1442 = vmatmul.f32.gmra.mxu0 %v1415
        %v1443 = vpop.f32.mrf.mxu0
        %v1444 = vadd.f32 %v1396, %v1443
        %1445 = vmatmul.f32.gmra.mxu0 %v1418
        %v1446 = vpop.f32.mrf.mxu0
        %v1447 = vadd.f32 %v1401, %v1446
        %1448 = vmatmul.f32.gmra.mxu0 %v1421
        %v1449 = vpop.f32.mrf.mxu0
        %v1450 = vadd.f32 %v1406, %v1449
        %1451 = vmatmul.f32.gmra.mxu0 %v1424
        %v1452 = vpop.f32.mrf.mxu0
        %v1453 = vadd.f32 %v1411, %v1452
        %1454 = vdwg.mxu0
        %1455 = vmatpush.msra.mxu0 0.0
        %1456 = vmatpush.msra.mxu0 0.0
        %1457 = vmatpush.msra.mxu0 0.0
        %1458 = vmatpush.msra.mxu0 0.0
        %1459 = vmatpush.msra.mxu0 0.0
        %1460 = vmatpush.msra.mxu0 0.0
        %1461 = vmatpush.msra.mxu0 0.0
        %1462 = vmatpush.msra.mxu0 0.0
        %1463 = vmatpush.msra.mxu0 0.0
        %1464 = vmatpush.msra.mxu0 0.0
        %1465 = vmatpush.msra.mxu0 0.0
        %1466 = vmatpush.msra.mxu0 0.0
        %1467 = vmatpush.msra.mxu0 %v1388
        %1468 = vmatpush.msra.mxu0 %v1386
        %1469 = vmatpush.msra.mxu0 %v1384
        %1470 = vmatpush.msra.mxu0 %v1382
        %1471 = vmatmul.f32.gmra.mxu0 %v1415
        %v1472 = vpop.f32.mrf.mxu0
        %v1473 = vadd.f32 %v1396, %v1472
        %1474 = vmatmul.f32.gmra.mxu0 %v1418
        %v1475 = vpop.f32.mrf.mxu0
        %v1476 = vadd.f32 %v1401, %v1475
        %1477 = vmatmul.f32.gmra.mxu0 %v1421
        %v1478 = vpop.f32.mrf.mxu0
        %v1479 = vadd.f32 %v1406, %v1478
        %1480 = vmatmul.f32.gmra.mxu0 %v1424
        %v1481 = vpop.f32.mrf.mxu0
        %v1482 = vadd.f32 %v1411, %v1481
        %1483 = vdwg.mxu0
        %v1484 = vadd.f32 %v1444, %v1447
        %v1485 = vadd.f32 %v1484, %v1450
        %v1486 = vadd.f32 %v1485, %v1453
        %v1487 = vrot.slane %v1486, 4
        %v1488 = vadd.f32 %v1486, %v1487
        %v1489 = vrot.slane %v1488, 2
        %v1490 = vadd.f32 %v1488, %v1489
        %v1491 = vrot.slane %v1490, 1
        %v1492 = vadd.f32 %v1490, %v1491
        %v1493 = vadd.f32 %v1473, %v1476
        %v1494 = vadd.f32 %v1493, %v1479
        %v1495 = vadd.f32 %v1494, %v1482
        %v1496 = vrot.slane %v1495, 4
        %v1497 = vadd.f32 %v1495, %v1496
        %v1498 = vrot.slane %v1497, 2
        %v1499 = vadd.f32 %v1497, %v1498
        %v1500 = vrot.slane %v1499, 1
        %v1501 = vadd.f32 %v1499, %v1500
        %v1502 = vmul.f32 %v1492, %v920
        %v1503 = vmul.f32 %v1501, %v920
        %v1504 = vsub.f32 %v1444, %v1502
        %v1505 = vsub.f32 %v1473, %v1503
        %v1506 = vsub.f32 %v1447, %v1502
        %v1507 = vsub.f32 %v1476, %v1503
        %v1508 = vsub.f32 %v1450, %v1502
        %v1509 = vsub.f32 %v1479, %v1503
        %v1510 = vsub.f32 %v1453, %v1502
        %v1511 = vsub.f32 %v1482, %v1503
        %v1512 = vmul.f32 %v1504, %v1504
        %v1513 = vmul.f32 %v1505, %v1505
        %v1514 = vmul.f32 %v1506, %v1506
        %v1515 = vmul.f32 %v1507, %v1507
        %v1516 = vmul.f32 %v1508, %v1508
        %v1517 = vmul.f32 %v1509, %v1509
        %v1518 = vmul.f32 %v1510, %v1510
        %v1519 = vmul.f32 %v1511, %v1511
        %v1520 = vadd.f32 %v1512, %v1514
        %v1521 = vadd.f32 %v1520, %v1516
        %v1522 = vadd.f32 %v1521, %v1518
        %v1523 = vrot.slane %v1522, 4
        %v1524 = vadd.f32 %v1522, %v1523
        %v1525 = vrot.slane %v1524, 2
        %v1526 = vadd.f32 %v1524, %v1525
        %v1527 = vrot.slane %v1526, 1
        %v1528 = vadd.f32 %v1526, %v1527
        %v1529 = vadd.f32 %v1513, %v1515
        %v1530 = vadd.f32 %v1529, %v1517
        %v1531 = vadd.f32 %v1530, %v1519
        %v1532 = vrot.slane %v1531, 4
        %v1533 = vadd.f32 %v1531, %v1532
        %v1534 = vrot.slane %v1533, 2
        %v1535 = vadd.f32 %v1533, %v1534
        %v1536 = vrot.slane %v1535, 1
        %v1537 = vadd.f32 %v1535, %v1536
        %v1538 = vmul.f32 %v1528, %v920
        %v1539 = vmul.f32 %v1537, %v920
        %v1540 = vadd.f32 %v1538, 1e-05
        %v1541 = vadd.f32 %v1539, 1e-05
        %v1542 = vrsqrt.pop %v1540
        %v1543 = vmul.f32 %v1542, %v1540
        %v1544 = vmul.f32 %v1543, %v1542
        %v1545 = vmul.f32 0.5, %v1544
        %v1546 = vsub.f32 1.5, %v1545
        %v1547 = vmul.f32 %v1542, %v1546
        %vm1548 = vweird.f32 %v1540
        %vm1549 = vweird.f32 %v1542
        %vm1550 = vmor %vm1548, %vm1549
        %v1551 = vsel %vm1550, %v1542, %v1547
        %v1552 = vrsqrt.pop %v1541
        %v1553 = vmul.f32 %v1552, %v1541
        %v1554 = vmul.f32 %v1553, %v1552
        %v1555 = vmul.f32 0.5, %v1554
        %v1556 = vsub.f32 1.5, %v1555
        %v1557 = vmul.f32 %v1552, %v1556
        %vm1558 = vweird.f32 %v1541
        %vm1559 = vweird.f32 %v1552
        %vm1560 = vmor %vm1558, %vm1559
        %v1561 = vsel %vm1560, %v1552, %v1557
        %v1562 = vmul.f32 %v1504, %v1551
        %v1563 = vmul.f32 %v1505, %v1561
        %v1564 = vmul.f32 %v1506, %v1551
        %v1565 = vmul.f32 %v1507, %v1561
        %v1566 = vmul.f32 %v1508, %v1551
        %v1567 = vmul.f32 %v1509, %v1561
        %v1568 = vmul.f32 %v1510, %v1551
        %v1569 = vmul.f32 %v1511, %v1561
        %1570 = vset.pattern.permute.xlu0 1
        %1571 = vperm.xlu0 %1570, %v439
        %v1572 = vpop.permute.xlu0 %1571
        %1574 = vset.pattern.permute.xlu0 1
        %1575 = vperm.xlu0 %1574, %v440
        %v1576 = vpop.permute.xlu0 %1575
        %1578 = vset.pattern.permute.xlu0 1
        %1579 = vperm.xlu0 %1578, %v441
        %v1580 = vpop.permute.xlu0 %1579
        %1582 = vset.pattern.permute.xlu0 1
        %1583 = vperm.xlu0 %1582, %v442
        %v1584 = vpop.permute.xlu0 %1583
        %v1586 = vmul.f32 %v1562, %v1572
        %v1587 = vmul.f32 %v1563, %v1572
        %v1588 = vmul.f32 %v1564, %v1576
        %v1589 = vmul.f32 %v1565, %v1576
        %v1590 = vmul.f32 %v1566, %v1580
        %v1591 = vmul.f32 %v1567, %v1580
        %v1592 = vmul.f32 %v1568, %v1584
        %v1593 = vmul.f32 %v1569, %v1584
        %1594 = vset.pattern.permute.xlu0 2
        %1595 = vperm.xlu0 %1594, %v439
        %v1596 = vpop.permute.xlu0 %1595
        %1598 = vset.pattern.permute.xlu0 2
        %1599 = vperm.xlu0 %1598, %v440
        %v1600 = vpop.permute.xlu0 %1599
        %1602 = vset.pattern.permute.xlu0 2
        %1603 = vperm.xlu0 %1602, %v441
        %v1604 = vpop.permute.xlu0 %1603
        %1606 = vset.pattern.permute.xlu0 2
        %1607 = vperm.xlu0 %1606, %v442
        %v1608 = vpop.permute.xlu0 %1607
        %v1610 = vadd.f32 %v1586, %v1596
        %v1611 = vadd.f32 %v1587, %v1596
        %v1612 = vadd.f32 %v1588, %v1600
        %v1613 = vadd.f32 %v1589, %v1600
        %v1614 = vadd.f32 %v1590, %v1604
        %v1615 = vadd.f32 %v1591, %v1604
        %v1616 = vadd.f32 %v1592, %v1608
        %v1617 = vadd.f32 %v1593, %v1608
        %v1618 = vmul.f32 %v1610, 0.5
        %v1619 = vmul.f32 %v1611, 0.5
        %v1620 = vmul.f32 %v1612, 0.5
        %v1621 = vmul.f32 %v1613, 0.5
        %v1622 = vmul.f32 %v1614, 0.5
        %v1623 = vmul.f32 %v1615, 0.5
        %v1624 = vmul.f32 %v1616, 0.5
        %v1625 = vmul.f32 %v1617, 0.5
        %v1626 = vmul.f32 %v1610, 0.70710677
        %v1627 = vmul.f32 %v1611, 0.70710677
        %v1628 = vmul.f32 %v1612, 0.70710677
        %v1629 = vmul.f32 %v1613, 0.70710677
        %v1630 = vmul.f32 %v1614, 0.70710677
        %v1631 = vmul.f32 %v1615, 0.70710677
        %v1632 = vmul.f32 %v1616, 0.70710677
        %v1633 = vmul.f32 %v1617, 0.70710677
        %v1634 = vmul.f32 %v1626, %v1626
        %v1635 = vmin.f32 16.0, %v1634
        %v1636 = vmul.f32 %v1635, 2.1237322e-06
        %v1637 = vadd.f32 %v1636, 0.00028619796
        %v1638 = vmul.f32 %v1635, %v1637
        %v1639 = vadd.f32 %v1638, 0.0036580483
        %v1640 = vmul.f32 %v1635, %v1639
        %v1641 = vadd.f32 %v1640, 0.05243302
        %v1642 = vmul.f32 %v1635, %v1641
        %v1643 = vadd.f32 %v1642, 0.18741608
        %v1644 = vmul.f32 %v1635, %v1643
        %v1645 = vadd.f32 %v1644, 1.1283791
        %v1646 = vmul.f32 %v1626, %v1645
        %v1647 = vmul.f32 %v1635, 3.8918573e-05
        %v1648 = vadd.f32 %v1647, 0.001143296
        %v1649 = vmul.f32 %v1635, %v1648
        %v1650 = vadd.f32 %v1649, 0.014752088
        %v1651 = vmul.f32 %v1635, %v1650
        %v1652 = vadd.f32 %v1651, 0.112945676
        %v1653 = vmul.f32 %v1635, %v1652
        %v1654 = vadd.f32 %v1653, 0.4994258
        %v1655 = vmul.f32 %v1635, %v1654
        %v1656 = vadd.f32 %v1655, 1.0
        %v1657 = vrcp.pop %v1656
        %v1658 = vmul.f32 %v1656, %v1657
        %v1659 = vsub.f32 1.0, %v1658
        %v1660 = vmul.f32 %v1657, %v1659
        %v1661 = vadd.f32 %v1657, %v1660
        %vm1662 = vweird.f32 %v1656
        %vm1663 = vweird.f32 %v1657
        %vm1664 = vmor %vm1662, %vm1663
        %v1665 = vsel %vm1664, %v1657, %v1661
        %v1666 = vand.u32 2147483647, %v1656
        %vm1667 = vcmp.eq.f32.partialorder %v1666, 8.507059e+37
        %v1668 = vand.u32 %v1656, 2147483648
        %v1669 = vor.u32 1.1754944e-38, %v1668
        %v1670 = vsel %vm1667, %v1669, %v1665
        %v1671 = vmul.f32 %v1646, %v1670
        %v1672 = vmin.f32 %v1671, 1.0
        %v1673 = vmax.f32 %v1672, -1.0
        %v1674 = vmul.f32 %v1627, %v1627
        %v1675 = vmin.f32 16.0, %v1674
        %v1676 = vmul.f32 %v1675, 2.1237322e-06
        %v1677 = vadd.f32 %v1676, 0.00028619796
        %v1678 = vmul.f32 %v1675, %v1677
        %v1679 = vadd.f32 %v1678, 0.0036580483
        %v1680 = vmul.f32 %v1675, %v1679
        %v1681 = vadd.f32 %v1680, 0.05243302
        %v1682 = vmul.f32 %v1675, %v1681
        %v1683 = vadd.f32 %v1682, 0.18741608
        %v1684 = vmul.f32 %v1675, %v1683
        %v1685 = vadd.f32 %v1684, 1.1283791
        %v1686 = vmul.f32 %v1627, %v1685
        %v1687 = vmul.f32 %v1675, 3.8918573e-05
        %v1688 = vadd.f32 %v1687, 0.001143296
        %v1689 = vmul.f32 %v1675, %v1688
        %v1690 = vadd.f32 %v1689, 0.014752088
        %v1691 = vmul.f32 %v1675, %v1690
        %v1692 = vadd.f32 %v1691, 0.112945676
        %v1693 = vmul.f32 %v1675, %v1692
        %v1694 = vadd.f32 %v1693, 0.4994258
        %v1695 = vmul.f32 %v1675, %v1694
        %v1696 = vadd.f32 %v1695, 1.0
        %v1697 = vrcp.pop %v1696
        %v1698 = vmul.f32 %v1696, %v1697
        %v1699 = vsub.f32 1.0, %v1698
        %v1700 = vmul.f32 %v1697, %v1699
        %v1701 = vadd.f32 %v1697, %v1700
        %vm1702 = vweird.f32 %v1696
        %vm1703 = vweird.f32 %v1697
        %vm1704 = vmor %vm1702, %vm1703
        %v1705 = vsel %vm1704, %v1697, %v1701
        %v1706 = vand.u32 2147483647, %v1696
        %vm1707 = vcmp.eq.f32.partialorder %v1706, 8.507059e+37
        %v1708 = vand.u32 %v1696, 2147483648
        %v1709 = vor.u32 1.1754944e-38, %v1708
        %v1710 = vsel %vm1707, %v1709, %v1705
        %v1711 = vmul.f32 %v1686, %v1710
        %v1712 = vmin.f32 %v1711, 1.0
        %v1713 = vmax.f32 %v1712, -1.0
        %v1714 = vmul.f32 %v1628, %v1628
        %v1715 = vmin.f32 16.0, %v1714
        %v1716 = vmul.f32 %v1715, 2.1237322e-06
        %v1717 = vadd.f32 %v1716, 0.00028619796
        %v1718 = vmul.f32 %v1715, %v1717
        %v1719 = vadd.f32 %v1718, 0.0036580483
        %v1720 = vmul.f32 %v1715, %v1719
        %v1721 = vadd.f32 %v1720, 0.05243302
        %v1722 = vmul.f32 %v1715, %v1721
        %v1723 = vadd.f32 %v1722, 0.18741608
        %v1724 = vmul.f32 %v1715, %v1723
        %v1725 = vadd.f32 %v1724, 1.1283791
        %v1726 = vmul.f32 %v1628, %v1725
        %v1727 = vmul.f32 %v1715, 3.8918573e-05
        %v1728 = vadd.f32 %v1727, 0.001143296
        %v1729 = vmul.f32 %v1715, %v1728
        %v1730 = vadd.f32 %v1729, 0.014752088
        %v1731 = vmul.f32 %v1715, %v1730
        %v1732 = vadd.f32 %v1731, 0.112945676
        %v1733 = vmul.f32 %v1715, %v1732
        %v1734 = vadd.f32 %v1733, 0.4994258
        %v1735 = vmul.f32 %v1715, %v1734
        %v1736 = vadd.f32 %v1735, 1.0
        %v1737 = vrcp.pop %v1736
        %v1738 = vmul.f32 %v1736, %v1737
        %v1739 = vsub.f32 1.0, %v1738
        %v1740 = vmul.f32 %v1737, %v1739
        %v1741 = vadd.f32 %v1737, %v1740
        %vm1742 = vweird.f32 %v1736
        %vm1743 = vweird.f32 %v1737
        %vm1744 = vmor %vm1742, %vm1743
        %v1745 = vsel %vm1744, %v1737, %v1741
        %v1746 = vand.u32 2147483647, %v1736
        %vm1747 = vcmp.eq.f32.partialorder %v1746, 8.507059e+37
        %v1748 = vand.u32 %v1736, 2147483648
        %v1749 = vor.u32 1.1754944e-38, %v1748
        %v1750 = vsel %vm1747, %v1749, %v1745
        %v1751 = vmul.f32 %v1726, %v1750
        %v1752 = vmin.f32 %v1751, 1.0
        %v1753 = vmax.f32 %v1752, -1.0
        %v1754 = vmul.f32 %v1629, %v1629
        %v1755 = vmin.f32 16.0, %v1754
        %v1756 = vmul.f32 %v1755, 2.1237322e-06
        %v1757 = vadd.f32 %v1756, 0.00028619796
        %v1758 = vmul.f32 %v1755, %v1757
        %v1759 = vadd.f32 %v1758, 0.0036580483
        %v1760 = vmul.f32 %v1755, %v1759
        %v1761 = vadd.f32 %v1760, 0.05243302
        %v1762 = vmul.f32 %v1755, %v1761
        %v1763 = vadd.f32 %v1762, 0.18741608
        %v1764 = vmul.f32 %v1755, %v1763
        %v1765 = vadd.f32 %v1764, 1.1283791
        %v1766 = vmul.f32 %v1629, %v1765
        %v1767 = vmul.f32 %v1755, 3.8918573e-05
        %v1768 = vadd.f32 %v1767, 0.001143296
        %v1769 = vmul.f32 %v1755, %v1768
        %v1770 = vadd.f32 %v1769, 0.014752088
        %v1771 = vmul.f32 %v1755, %v1770
        %v1772 = vadd.f32 %v1771, 0.112945676
        %v1773 = vmul.f32 %v1755, %v1772
        %v1774 = vadd.f32 %v1773, 0.4994258
        %v1775 = vmul.f32 %v1755, %v1774
        %v1776 = vadd.f32 %v1775, 1.0
        %v1777 = vrcp.pop %v1776
        %v1778 = vmul.f32 %v1776, %v1777
        %v1779 = vsub.f32 1.0, %v1778
        %v1780 = vmul.f32 %v1777, %v1779
        %v1781 = vadd.f32 %v1777, %v1780
        %vm1782 = vweird.f32 %v1776
        %vm1783 = vweird.f32 %v1777
        %vm1784 = vmor %vm1782, %vm1783
        %v1785 = vsel %vm1784, %v1777, %v1781
        %v1786 = vand.u32 2147483647, %v1776
        %vm1787 = vcmp.eq.f32.partialorder %v1786, 8.507059e+37
        %v1788 = vand.u32 %v1776, 2147483648
        %v1789 = vor.u32 1.1754944e-38, %v1788
        %v1790 = vsel %vm1787, %v1789, %v1785
        %v1791 = vmul.f32 %v1766, %v1790
        %v1792 = vmin.f32 %v1791, 1.0
        %v1793 = vmax.f32 %v1792, -1.0
        %v1794 = vmul.f32 %v1630, %v1630
        %v1795 = vmin.f32 16.0, %v1794
        %v1796 = vmul.f32 %v1795, 2.1237322e-06
        %v1797 = vadd.f32 %v1796, 0.00028619796
        %v1798 = vmul.f32 %v1795, %v1797
        %v1799 = vadd.f32 %v1798, 0.0036580483
        %v1800 = vmul.f32 %v1795, %v1799
        %v1801 = vadd.f32 %v1800, 0.05243302
        %v1802 = vmul.f32 %v1795, %v1801
        %v1803 = vadd.f32 %v1802, 0.18741608
        %v1804 = vmul.f32 %v1795, %v1803
        %v1805 = vadd.f32 %v1804, 1.1283791
        %v1806 = vmul.f32 %v1630, %v1805
        %v1807 = vmul.f32 %v1795, 3.8918573e-05
        %v1808 = vadd.f32 %v1807, 0.001143296
        %v1809 = vmul.f32 %v1795, %v1808
        %v1810 = vadd.f32 %v1809, 0.014752088
        %v1811 = vmul.f32 %v1795, %v1810
        %v1812 = vadd.f32 %v1811, 0.112945676
        %v1813 = vmul.f32 %v1795, %v1812
        %v1814 = vadd.f32 %v1813, 0.4994258
        %v1815 = vmul.f32 %v1795, %v1814
        %v1816 = vadd.f32 %v1815, 1.0
        %v1817 = vrcp.pop %v1816
        %v1818 = vmul.f32 %v1816, %v1817
        %v1819 = vsub.f32 1.0, %v1818
        %v1820 = vmul.f32 %v1817, %v1819
        %v1821 = vadd.f32 %v1817, %v1820
        %vm1822 = vweird.f32 %v1816
        %vm1823 = vweird.f32 %v1817
        %vm1824 = vmor %vm1822, %vm1823
        %v1825 = vsel %vm1824, %v1817, %v1821
        %v1826 = vand.u32 2147483647, %v1816
        %vm1827 = vcmp.eq.f32.partialorder %v1826, 8.507059e+37
        %v1828 = vand.u32 %v1816, 2147483648
        %v1829 = vor.u32 1.1754944e-38, %v1828
        %v1830 = vsel %vm1827, %v1829, %v1825
        %v1831 = vmul.f32 %v1806, %v1830
        %v1832 = vmin.f32 %v1831, 1.0
        %v1833 = vmax.f32 %v1832, -1.0
        %v1834 = vmul.f32 %v1631, %v1631
        %v1835 = vmin.f32 16.0, %v1834
        %v1836 = vmul.f32 %v1835, 2.1237322e-06
        %v1837 = vadd.f32 %v1836, 0.00028619796
        %v1838 = vmul.f32 %v1835, %v1837
        %v1839 = vadd.f32 %v1838, 0.0036580483
        %v1840 = vmul.f32 %v1835, %v1839
        %v1841 = vadd.f32 %v1840, 0.05243302
        %v1842 = vmul.f32 %v1835, %v1841
        %v1843 = vadd.f32 %v1842, 0.18741608
        %v1844 = vmul.f32 %v1835, %v1843
        %v1845 = vadd.f32 %v1844, 1.1283791
        %v1846 = vmul.f32 %v1631, %v1845
        %v1847 = vmul.f32 %v1835, 3.8918573e-05
        %v1848 = vadd.f32 %v1847, 0.001143296
        %v1849 = vmul.f32 %v1835, %v1848
        %v1850 = vadd.f32 %v1849, 0.014752088
        %v1851 = vmul.f32 %v1835, %v1850
        %v1852 = vadd.f32 %v1851, 0.112945676
        %v1853 = vmul.f32 %v1835, %v1852
        %v1854 = vadd.f32 %v1853, 0.4994258
        %v1855 = vmul.f32 %v1835, %v1854
        %v1856 = vadd.f32 %v1855, 1.0
        %v1857 = vrcp.pop %v1856
        %v1858 = vmul.f32 %v1856, %v1857
        %v1859 = vsub.f32 1.0, %v1858
        %v1860 = vmul.f32 %v1857, %v1859
        %v1861 = vadd.f32 %v1857, %v1860
        %vm1862 = vweird.f32 %v1856
        %vm1863 = vweird.f32 %v1857
        %vm1864 = vmor %vm1862, %vm1863
        %v1865 = vsel %vm1864, %v1857, %v1861
        %v1866 = vand.u32 2147483647, %v1856
        %vm1867 = vcmp.eq.f32.partialorder %v1866, 8.507059e+37
        %v1868 = vand.u32 %v1856, 2147483648
        %v1869 = vor.u32 1.1754944e-38, %v1868
        %v1870 = vsel %vm1867, %v1869, %v1865
        %v1871 = vmul.f32 %v1846, %v1870
        %v1872 = vmin.f32 %v1871, 1.0
        %v1873 = vmax.f32 %v1872, -1.0
        %v1874 = vmul.f32 %v1632, %v1632
        %v1875 = vmin.f32 16.0, %v1874
        %v1876 = vmul.f32 %v1875, 2.1237322e-06
        %v1877 = vadd.f32 %v1876, 0.00028619796
        %v1878 = vmul.f32 %v1875, %v1877
        %v1879 = vadd.f32 %v1878, 0.0036580483
        %v1880 = vmul.f32 %v1875, %v1879
        %v1881 = vadd.f32 %v1880, 0.05243302
        %v1882 = vmul.f32 %v1875, %v1881
        %v1883 = vadd.f32 %v1882, 0.18741608
        %v1884 = vmul.f32 %v1875, %v1883
        %v1885 = vadd.f32 %v1884, 1.1283791
        %v1886 = vmul.f32 %v1632, %v1885
        %v1887 = vmul.f32 %v1875, 3.8918573e-05
        %v1888 = vadd.f32 %v1887, 0.001143296
        %v1889 = vmul.f32 %v1875, %v1888
        %v1890 = vadd.f32 %v1889, 0.014752088
        %v1891 = vmul.f32 %v1875, %v1890
        %v1892 = vadd.f32 %v1891, 0.112945676
        %v1893 = vmul.f32 %v1875, %v1892
        %v1894 = vadd.f32 %v1893, 0.4994258
        %v1895 = vmul.f32 %v1875, %v1894
        %v1896 = vadd.f32 %v1895, 1.0
        %v1897 = vrcp.pop %v1896
        %v1898 = vmul.f32 %v1896, %v1897
        %v1899 = vsub.f32 1.0, %v1898
        %v1900 = vmul.f32 %v1897, %v1899
        %v1901 = vadd.f32 %v1897, %v1900
        %vm1902 = vweird.f32 %v1896
        %vm1903 = vweird.f32 %v1897
        %vm1904 = vmor %vm1902, %vm1903
        %v1905 = vsel %vm1904, %v1897, %v1901
        %v1906 = vand.u32 2147483647, %v1896
        %vm1907 = vcmp.eq.f32.partialorder %v1906, 8.507059e+37
        %v1908 = vand.u32 %v1896, 2147483648
        %v1909 = vor.u32 1.1754944e-38, %v1908
        %v1910 = vsel %vm1907, %v1909, %v1905
        %v1911 = vmul.f32 %v1886, %v1910
        %v1912 = vmin.f32 %v1911, 1.0
        %v1913 = vmax.f32 %v1912, -1.0
        %v1914 = vmul.f32 %v1633, %v1633
        %v1915 = vmin.f32 16.0, %v1914
        %v1916 = vmul.f32 %v1915, 2.1237322e-06
        %v1917 = vadd.f32 %v1916, 0.00028619796
        %v1918 = vmul.f32 %v1915, %v1917
        %v1919 = vadd.f32 %v1918, 0.0036580483
        %v1920 = vmul.f32 %v1915, %v1919
        %v1921 = vadd.f32 %v1920, 0.05243302
        %v1922 = vmul.f32 %v1915, %v1921
        %v1923 = vadd.f32 %v1922, 0.18741608
        %v1924 = vmul.f32 %v1915, %v1923
        %v1925 = vadd.f32 %v1924, 1.1283791
        %v1926 = vmul.f32 %v1633, %v1925
        %v1927 = vmul.f32 %v1915, 3.8918573e-05
        %v1928 = vadd.f32 %v1927, 0.001143296
        %v1929 = vmul.f32 %v1915, %v1928
        %v1930 = vadd.f32 %v1929, 0.014752088
        %v1931 = vmul.f32 %v1915, %v1930
        %v1932 = vadd.f32 %v1931, 0.112945676
        %v1933 = vmul.f32 %v1915, %v1932
        %v1934 = vadd.f32 %v1933, 0.4994258
        %v1935 = vmul.f32 %v1915, %v1934
        %v1936 = vadd.f32 %v1935, 1.0
        %v1937 = vrcp.pop %v1936
        %v1938 = vmul.f32 %v1936, %v1937
        %v1939 = vsub.f32 1.0, %v1938
        %v1940 = vmul.f32 %v1937, %v1939
        %v1941 = vadd.f32 %v1937, %v1940
        %vm1942 = vweird.f32 %v1936
        %vm1943 = vweird.f32 %v1937
        %vm1944 = vmor %vm1942, %vm1943
        %v1945 = vsel %vm1944, %v1937, %v1941
        %v1946 = vand.u32 2147483647, %v1936
        %vm1947 = vcmp.eq.f32.partialorder %v1946, 8.507059e+37
        %v1948 = vand.u32 %v1936, 2147483648
        %v1949 = vor.u32 1.1754944e-38, %v1948
        %v1950 = vsel %vm1947, %v1949, %v1945
        %v1951 = vmul.f32 %v1926, %v1950
        %v1952 = vmin.f32 %v1951, 1.0
        %v1953 = vmax.f32 %v1952, -1.0
        %v1954 = vadd.f32 %v1673, 1.0
        %v1955 = vadd.f32 %v1713, 1.0
        %v1956 = vadd.f32 %v1753, 1.0
        %v1957 = vadd.f32 %v1793, 1.0
        %v1958 = vadd.f32 %v1833, 1.0
        %v1959 = vadd.f32 %v1873, 1.0
        %v1960 = vadd.f32 %v1913, 1.0
        %v1961 = vadd.f32 %v1953, 1.0
        %v1962 = vmul.f32 %v1618, %v1954
        %v1963 = vmul.f32 %v1619, %v1955
        %v1964 = vmul.f32 %v1620, %v1956
        %v1965 = vmul.f32 %v1621, %v1957
        %v1966 = vmul.f32 %v1622, %v1958
        %v1967 = vmul.f32 %v1623, %v1959
        %v1968 = vmul.f32 %v1624, %v1960
        %v1969 = vmul.f32 %v1625, %v1961
        %v1970 = vld [vmem:[%s7] sm:$0xff]
        %v1971 = vld [vmem:[%s7 + $0x8] sm:$0xff]
        %1973 = vset.pattern.permute.xlu0 0
        %1974 = vperm.xlu0 %1973, %v443
        %v1975 = vpop.permute.xlu0 %1974
        %1978 = vset.pattern.permute.xlu0 0
        %1979 = vperm.xlu0 %1978, %v444
        %v1980 = vpop.permute.xlu0 %1979
        %v1983 = vsel %vm1413, %v1970, 0
        %v1986 = vsel %vm1413, %v1971, 0
        %1988 = vmatpush.msra.mxu0 0.0
        %1989 = vmatpush.msra.mxu0 0.0
        %1990 = vmatpush.msra.mxu0 0.0
        %1991 = vmatpush.msra.mxu0 0.0
        %1992 = vmatpush.msra.mxu0 0.0
        %1993 = vmatpush.msra.mxu0 0.0
        %1994 = vmatpush.msra.mxu0 0.0
        %1995 = vmatpush.msra.mxu0 0.0
        %1996 = vmatpush.msra.mxu0 0.0
        %1997 = vmatpush.msra.mxu0 0.0
        %1998 = vmatpush.msra.mxu0 0.0
        %1999 = vmatpush.msra.mxu0 0.0
        %2000 = vmatpush.msra.mxu0 %v1968
        %2001 = vmatpush.msra.mxu0 %v1966
        %2002 = vmatpush.msra.mxu0 %v1964
        %2003 = vmatpush.msra.mxu0 %v1962
        %2004 = vmatmul.f32.gmra.mxu0 %v1983
        %v2005 = vpop.f32.mrf.mxu0
        %v2006 = vadd.f32 %v1975, %v2005
        %2007 = vmatmul.f32.gmra.mxu0 %v1986
        %v2008 = vpop.f32.mrf.mxu0
        %v2009 = vadd.f32 %v1980, %v2008
        %2010 = vdwg.mxu0
        %2011 = vmatpush.msra.mxu0 0.0
        %2012 = vmatpush.msra.mxu0 0.0
        %2013 = vmatpush.msra.mxu0 0.0
        %2014 = vmatpush.msra.mxu0 0.0
        %2015 = vmatpush.msra.mxu0 0.0
        %2016 = vmatpush.msra.mxu0 0.0
        %2017 = vmatpush.msra.mxu0 0.0
        %2018 = vmatpush.msra.mxu0 0.0
        %2019 = vmatpush.msra.mxu0 0.0
        %2020 = vmatpush.msra.mxu0 0.0
        %2021 = vmatpush.msra.mxu0 0.0
        %2022 = vmatpush.msra.mxu0 0.0
        %2023 = vmatpush.msra.mxu0 %v1969
        %2024 = vmatpush.msra.mxu0 %v1967
        %2025 = vmatpush.msra.mxu0 %v1965
        %2026 = vmatpush.msra.mxu0 %v1963
        %2027 = vmatmul.f32.gmra.mxu0 %v1983
        %v2028 = vpop.f32.mrf.mxu0
        %v2029 = vadd.f32 %v1975, %v2028
        %2030 = vmatmul.f32.gmra.mxu0 %v1986
        %v2031 = vpop.f32.mrf.mxu0
        %v2032 = vadd.f32 %v1980, %v2031
        %2033 = vdwg.mxu0
        %v2034 = vadd.f32 %v2006, %v2009
        %v2035 = vrot.slane %v2034, 4
        %v2036 = vadd.f32 %v2034, %v2035
        %v2037 = vrot.slane %v2036, 2
        %v2038 = vadd.f32 %v2036, %v2037
        %v2039 = vrot.slane %v2038, 1
        %v2040 = vadd.f32 %v2038, %v2039
        %v2041 = vadd.f32 %v2029, %v2032
        %v2042 = vrot.slane %v2041, 4
        %v2043 = vadd.f32 %v2041, %v2042
        %v2044 = vrot.slane %v2043, 2
        %v2045 = vadd.f32 %v2043, %v2044
        %v2046 = vrot.slane %v2045, 1
        %v2047 = vadd.f32 %v2045, %v2046
        %v2048 = vmul.f32 %v2040, %v548
        %v2049 = vmul.f32 %v2047, %v548
        %v2050 = vsub.f32 %v2006, %v2048
        %v2051 = vsub.f32 %v2029, %v2049
        %v2052 = vsub.f32 %v2009, %v2048
        %v2053 = vsub.f32 %v2032, %v2049
        %v2054 = vmul.f32 %v2050, %v2050
        %v2055 = vmul.f32 %v2051, %v2051
        %v2056 = vmul.f32 %v2052, %v2052
        %v2057 = vmul.f32 %v2053, %v2053
        %v2058 = vadd.f32 %v2054, %v2056
        %v2059 = vrot.slane %v2058, 4
        %v2060 = vadd.f32 %v2058, %v2059
        %v2061 = vrot.slane %v2060, 2
        %v2062 = vadd.f32 %v2060, %v2061
        %v2063 = vrot.slane %v2062, 1
        %v2064 = vadd.f32 %v2062, %v2063
        %v2065 = vadd.f32 %v2055, %v2057
        %v2066 = vrot.slane %v2065, 4
        %v2067 = vadd.f32 %v2065, %v2066
        %v2068 = vrot.slane %v2067, 2
        %v2069 = vadd.f32 %v2067, %v2068
        %v2070 = vrot.slane %v2069, 1
        %v2071 = vadd.f32 %v2069, %v2070
        %v2072 = vmul.f32 %v2064, %v548
        %v2073 = vmul.f32 %v2071, %v548
        %v2074 = vadd.f32 %v2072, 1e-05
        %v2075 = vadd.f32 %v2073, 1e-05
        %v2076 = vrsqrt.pop %v2074
        %v2077 = vmul.f32 %v2076, %v2074
        %v2078 = vmul.f32 %v2077, %v2076
        %v2079 = vmul.f32 0.5, %v2078
        %v2080 = vsub.f32 1.5, %v2079
        %v2081 = vmul.f32 %v2076, %v2080
        %vm2082 = vweird.f32 %v2074
        %vm2083 = vweird.f32 %v2076
        %vm2084 = vmor %vm2082, %vm2083
        %v2085 = vsel %vm2084, %v2076, %v2081
        %v2086 = vrsqrt.pop %v2075
        %v2087 = vmul.f32 %v2086, %v2075
        %v2088 = vmul.f32 %v2087, %v2086
        %v2089 = vmul.f32 0.5, %v2088
        %v2090 = vsub.f32 1.5, %v2089
        %v2091 = vmul.f32 %v2086, %v2090
        %vm2092 = vweird.f32 %v2075
        %vm2093 = vweird.f32 %v2086
        %vm2094 = vmor %vm2092, %vm2093
        %v2095 = vsel %vm2094, %v2086, %v2091
        %v2096 = vmul.f32 %v2050, %v2085
        %v2097 = vmul.f32 %v2051, %v2095
        %v2098 = vmul.f32 %v2052, %v2085
        %v2099 = vmul.f32 %v2053, %v2095
        %2100 = vset.pattern.permute.xlu0 1
        %2101 = vperm.xlu0 %2100, %v443
        %v2102 = vpop.permute.xlu0 %2101
        %2104 = vset.pattern.permute.xlu0 1
        %2105 = vperm.xlu0 %2104, %v444
        %v2106 = vpop.permute.xlu0 %2105
        %v2108 = vmul.f32 %v2096, %v2102
        %v2109 = vmul.f32 %v2097, %v2102
        %v2110 = vmul.f32 %v2098, %v2106
        %v2111 = vmul.f32 %v2099, %v2106
        %2112 = vset.pattern.permute.xlu0 2
        %2113 = vperm.xlu0 %2112, %v443
        %v2114 = vpop.permute.xlu0 %2113
        %2116 = vset.pattern.permute.xlu0 2
        %2117 = vperm.xlu0 %2116, %v444
        %v2118 = vpop.permute.xlu0 %2117
        %v2120 = vadd.f32 %v2108, %v2114
        %v2121 = vadd.f32 %v2109, %v2114
        %v2122 = vadd.f32 %v2110, %v2118
        %v2123 = vadd.f32 %v2111, %v2118
        %v2124 = vmul.f32 %v2120, 0.5
        %v2125 = vmul.f32 %v2121, 0.5
        %v2126 = vmul.f32 %v2122, 0.5
        %v2127 = vmul.f32 %v2123, 0.5
        %v2128 = vmul.f32 %v2120, 0.70710677
        %v2129 = vmul.f32 %v2121, 0.70710677
        %v2130 = vmul.f32 %v2122, 0.70710677
        %v2131 = vmul.f32 %v2123, 0.70710677
        %v2132 = vmul.f32 %v2128, %v2128
        %v2133 = vmin.f32 16.0, %v2132
        %v2134 = vmul.f32 %v2133, 2.1237322e-06
        %v2135 = vadd.f32 %v2134, 0.00028619796
        %v2136 = vmul.f32 %v2133, %v2135
        %v2137 = vadd.f32 %v2136, 0.0036580483
        %v2138 = vmul.f32 %v2133, %v2137
        %v2139 = vadd.f32 %v2138, 0.05243302
        %v2140 = vmul.f32 %v2133, %v2139
        %v2141 = vadd.f32 %v2140, 0.18741608
        %v2142 = vmul.f32 %v2133, %v2141
        %v2143 = vadd.f32 %v2142, 1.1283791
        %v2144 = vmul.f32 %v2128, %v2143
        %v2145 = vmul.f32 %v2133, 3.8918573e-05
        %v2146 = vadd.f32 %v2145, 0.001143296
        %v2147 = vmul.f32 %v2133, %v2146
        %v2148 = vadd.f32 %v2147, 0.014752088
        %v2149 = vmul.f32 %v2133, %v2148
        %v2150 = vadd.f32 %v2149, 0.112945676
        %v2151 = vmul.f32 %v2133, %v2150
        %v2152 = vadd.f32 %v2151, 0.4994258
        %v2153 = vmul.f32 %v2133, %v2152
        %v2154 = vadd.f32 %v2153, 1.0
        %v2155 = vrcp.pop %v2154
        %v2156 = vmul.f32 %v2154, %v2155
        %v2157 = vsub.f32 1.0, %v2156
        %v2158 = vmul.f32 %v2155, %v2157
        %v2159 = vadd.f32 %v2155, %v2158
        %vm2160 = vweird.f32 %v2154
        %vm2161 = vweird.f32 %v2155
        %vm2162 = vmor %vm2160, %vm2161
        %v2163 = vsel %vm2162, %v2155, %v2159
        %v2164 = vand.u32 2147483647, %v2154
        %vm2165 = vcmp.eq.f32.partialorder %v2164, 8.507059e+37
        %v2166 = vand.u32 %v2154, 2147483648
        %v2167 = vor.u32 1.1754944e-38, %v2166
        %v2168 = vsel %vm2165, %v2167, %v2163
        %v2169 = vmul.f32 %v2144, %v2168
        %v2170 = vmin.f32 %v2169, 1.0
        %v2171 = vmax.f32 %v2170, -1.0
        %v2172 = vmul.f32 %v2129, %v2129
        %v2173 = vmin.f32 16.0, %v2172
        %v2174 = vmul.f32 %v2173, 2.1237322e-06
        %v2175 = vadd.f32 %v2174, 0.00028619796
        %v2176 = vmul.f32 %v2173, %v2175
        %v2177 = vadd.f32 %v2176, 0.0036580483
        %v2178 = vmul.f32 %v2173, %v2177
        %v2179 = vadd.f32 %v2178, 0.05243302
        %v2180 = vmul.f32 %v2173, %v2179
        %v2181 = vadd.f32 %v2180, 0.18741608
        %v2182 = vmul.f32 %v2173, %v2181
        %v2183 = vadd.f32 %v2182, 1.1283791
        %v2184 = vmul.f32 %v2129, %v2183
        %v2185 = vmul.f32 %v2173, 3.8918573e-05
        %v2186 = vadd.f32 %v2185, 0.001143296
        %v2187 = vmul.f32 %v2173, %v2186
        %v2188 = vadd.f32 %v2187, 0.014752088
        %v2189 = vmul.f32 %v2173, %v2188
        %v2190 = vadd.f32 %v2189, 0.112945676
        %v2191 = vmul.f32 %v2173, %v2190
        %v2192 = vadd.f32 %v2191, 0.4994258
        %v2193 = vmul.f32 %v2173, %v2192
        %v2194 = vadd.f32 %v2193, 1.0
        %v2195 = vrcp.pop %v2194
        %v2196 = vmul.f32 %v2194, %v2195
        %v2197 = vsub.f32 1.0, %v2196
        %v2198 = vmul.f32 %v2195, %v2197
        %v2199 = vadd.f32 %v2195, %v2198
        %vm2200 = vweird.f32 %v2194
        %vm2201 = vweird.f32 %v2195
        %vm2202 = vmor %vm2200, %vm2201
        %v2203 = vsel %vm2202, %v2195, %v2199
        %v2204 = vand.u32 2147483647, %v2194
        %vm2205 = vcmp.eq.f32.partialorder %v2204, 8.507059e+37
        %v2206 = vand.u32 %v2194, 2147483648
        %v2207 = vor.u32 1.1754944e-38, %v2206
        %v2208 = vsel %vm2205, %v2207, %v2203
        %v2209 = vmul.f32 %v2184, %v2208
        %v2210 = vmin.f32 %v2209, 1.0
        %v2211 = vmax.f32 %v2210, -1.0
        %v2212 = vmul.f32 %v2130, %v2130
        %v2213 = vmin.f32 16.0, %v2212
        %v2214 = vmul.f32 %v2213, 2.1237322e-06
        %v2215 = vadd.f32 %v2214, 0.00028619796
        %v2216 = vmul.f32 %v2213, %v2215
        %v2217 = vadd.f32 %v2216, 0.0036580483
        %v2218 = vmul.f32 %v2213, %v2217
        %v2219 = vadd.f32 %v2218, 0.05243302
        %v2220 = vmul.f32 %v2213, %v2219
        %v2221 = vadd.f32 %v2220, 0.18741608
        %v2222 = vmul.f32 %v2213, %v2221
        %v2223 = vadd.f32 %v2222, 1.1283791
        %v2224 = vmul.f32 %v2130, %v2223
        %v2225 = vmul.f32 %v2213, 3.8918573e-05
        %v2226 = vadd.f32 %v2225, 0.001143296
        %v2227 = vmul.f32 %v2213, %v2226
        %v2228 = vadd.f32 %v2227, 0.014752088
        %v2229 = vmul.f32 %v2213, %v2228
        %v2230 = vadd.f32 %v2229, 0.112945676
        %v2231 = vmul.f32 %v2213, %v2230
        %v2232 = vadd.f32 %v2231, 0.4994258
        %v2233 = vmul.f32 %v2213, %v2232
        %v2234 = vadd.f32 %v2233, 1.0
        %v2235 = vrcp.pop %v2234
        %v2236 = vmul.f32 %v2234, %v2235
        %v2237 = vsub.f32 1.0, %v2236
        %v2238 = vmul.f32 %v2235, %v2237
        %v2239 = vadd.f32 %v2235, %v2238
        %vm2240 = vweird.f32 %v2234
        %vm2241 = vweird.f32 %v2235
        %vm2242 = vmor %vm2240, %vm2241
        %v2243 = vsel %vm2242, %v2235, %v2239
        %v2244 = vand.u32 2147483647, %v2234
        %vm2245 = vcmp.eq.f32.partialorder %v2244, 8.507059e+37
        %v2246 = vand.u32 %v2234, 2147483648
        %v2247 = vor.u32 1.1754944e-38, %v2246
        %v2248 = vsel %vm2245, %v2247, %v2243
        %v2249 = vmul.f32 %v2224, %v2248
        %v2250 = vmin.f32 %v2249, 1.0
        %v2251 = vmax.f32 %v2250, -1.0
        %v2252 = vmul.f32 %v2131, %v2131
        %v2253 = vmin.f32 16.0, %v2252
        %v2254 = vmul.f32 %v2253, 2.1237322e-06
        %v2255 = vadd.f32 %v2254, 0.00028619796
        %v2256 = vmul.f32 %v2253, %v2255
        %v2257 = vadd.f32 %v2256, 0.0036580483
        %v2258 = vmul.f32 %v2253, %v2257
        %v2259 = vadd.f32 %v2258, 0.05243302
        %v2260 = vmul.f32 %v2253, %v2259
        %v2261 = vadd.f32 %v2260, 0.18741608
        %v2262 = vmul.f32 %v2253, %v2261
        %v2263 = vadd.f32 %v2262, 1.1283791
        %v2264 = vmul.f32 %v2131, %v2263
        %v2265 = vmul.f32 %v2253, 3.8918573e-05
        %v2266 = vadd.f32 %v2265, 0.001143296
        %v2267 = vmul.f32 %v2253, %v2266
        %v2268 = vadd.f32 %v2267, 0.014752088
        %v2269 = vmul.f32 %v2253, %v2268
        %v2270 = vadd.f32 %v2269, 0.112945676
        %v2271 = vmul.f32 %v2253, %v2270
        %v2272 = vadd.f32 %v2271, 0.4994258
        %v2273 = vmul.f32 %v2253, %v2272
        %v2274 = vadd.f32 %v2273, 1.0
        %v2275 = vrcp.pop %v2274
        %v2276 = vmul.f32 %v2274, %v2275
        %v2277 = vsub.f32 1.0, %v2276
        %v2278 = vmul.f32 %v2275, %v2277
        %v2279 = vadd.f32 %v2275, %v2278
        %vm2280 = vweird.f32 %v2274
        %vm2281 = vweird.f32 %v2275
        %vm2282 = vmor %vm2280, %vm2281
        %v2283 = vsel %vm2282, %v2275, %v2279
        %v2284 = vand.u32 2147483647, %v2274
        %vm2285 = vcmp.eq.f32.partialorder %v2284, 8.507059e+37
        %v2286 = vand.u32 %v2274, 2147483648
        %v2287 = vor.u32 1.1754944e-38, %v2286
        %v2288 = vsel %vm2285, %v2287, %v2283
        %v2289 = vmul.f32 %v2264, %v2288
        %v2290 = vmin.f32 %v2289, 1.0
        %v2291 = vmax.f32 %v2290, -1.0
        %v2292 = vadd.f32 %v2171, 1.0
        %v2293 = vadd.f32 %v2211, 1.0
        %v2294 = vadd.f32 %v2251, 1.0
        %v2295 = vadd.f32 %v2291, 1.0
        %v2296 = vmul.f32 %v2124, %v2292
        %v2297 = vmul.f32 %v2125, %v2293
        %v2298 = vmul.f32 %v2126, %v2294
        %v2299 = vmul.f32 %v2127, %v2295
        %v2300 = vld [vmem:[%s9] sm:$0xff]
        %v2301 = vld [vmem:[%s9 + $0x8] sm:$0xff]
        %2303 = vset.pattern.permute.xlu0 0
        %2304 = vperm.xlu0 %2303, %v445
        %v2305 = vpop.permute.xlu0 %2304
        %2308 = vset.pattern.permute.xlu0 0
        %2309 = vperm.xlu0 %2308, %v446
        %v2310 = vpop.permute.xlu0 %2309
        %v2313 = vsel %vm825, %v2300, 0
        %v2316 = vsel %vm825, %v2301, 0
        %2318 = vmatpush.msra.mxu0 0.0
        %2319 = vmatpush.msra.mxu0 0.0
        %2320 = vmatpush.msra.mxu0 0.0
        %2321 = vmatpush.msra.mxu0 0.0
        %2322 = vmatpush.msra.mxu0 0.0
        %2323 = vmatpush.msra.mxu0 0.0
        %2324 = vmatpush.msra.mxu0 0.0
        %2325 = vmatpush.msra.mxu0 0.0
        %2326 = vmatpush.msra.mxu0 0.0
        %2327 = vmatpush.msra.mxu0 0.0
        %2328 = vmatpush.msra.mxu0 0.0
        %2329 = vmatpush.msra.mxu0 0.0
        %2330 = vmatpush.msra.mxu0 0.0
        %2331 = vmatpush.msra.mxu0 0.0
        %2332 = vmatpush.msra.mxu0 %v2298
        %2333 = vmatpush.msra.mxu0 %v2296
        %2334 = vmatmul.f32.gmra.mxu0 %v2313
        %v2335 = vpop.f32.mrf.mxu0
        %v2336 = vadd.f32 %v2305, %v2335
        %2337 = vmatmul.f32.gmra.mxu0 %v2316
        %v2338 = vpop.f32.mrf.mxu0
        %v2339 = vadd.f32 %v2310, %v2338
        %2340 = vdwg.mxu0
        %2341 = vmatpush.msra.mxu0 0.0
        %2342 = vmatpush.msra.mxu0 0.0
        %2343 = vmatpush.msra.mxu0 0.0
        %2344 = vmatpush.msra.mxu0 0.0
        %2345 = vmatpush.msra.mxu0 0.0
        %2346 = vmatpush.msra.mxu0 0.0
        %2347 = vmatpush.msra.mxu0 0.0
        %2348 = vmatpush.msra.mxu0 0.0
        %2349 = vmatpush.msra.mxu0 0.0
        %2350 = vmatpush.msra.mxu0 0.0
        %2351 = vmatpush.msra.mxu0 0.0
        %2352 = vmatpush.msra.mxu0 0.0
        %2353 = vmatpush.msra.mxu0 0.0
        %2354 = vmatpush.msra.mxu0 0.0
        %2355 = vmatpush.msra.mxu0 %v2299
        %2356 = vmatpush.msra.mxu0 %v2297
        %2357 = vmatmul.f32.gmra.mxu0 %v2313
        %v2358 = vpop.f32.mrf.mxu0
        %v2359 = vadd.f32 %v2305, %v2358
        %2360 = vmatmul.f32.gmra.mxu0 %v2316
        %v2361 = vpop.f32.mrf.mxu0
        %v2362 = vadd.f32 %v2310, %v2361
        %2363 = vdwg.mxu0
        %2364 = vst [vmem:[%s430] sm:$0xff] %v2336
        %2365 = vst [vmem:[%s430 + $0x8] sm:$0xff] %v2359
        %2366 = vst [vmem:[%s430 + $0x10] sm:$0xff] %v2339
        %2367 = vst [vmem:[%s430 + $0x18] sm:$0xff] %v2362
        %s2368 = sand.u32 %s266, 1
        %s2369 = sand.u32 %s266, 1
        %s2370 = smul.addr %s2369, 32
        %s2371 = scalar_lea.vmem [#allocation3], %s2370
        // Predicated region
        $region88: #{_general_mlp_forward_jit.1} parent=82 // pred_check
          %p2372 = pneg %p276
        $region89: #{_general_mlp_forward_jit.1} parent=82 // pred_check_branch
          %2374 = sbr.rel (%p2372) target = $region91
        $region90: #{_general_mlp_forward_jit.1} parent=82 // pred_region
          %s2375 = smul.u32 2, %s22
          %s2376 = smul.addr %s2375, 8
          %s2377 = scalar_lea.vmem %s11, %s2376
          // Predicated region
          $region92: #{_general_mlp_forward_jit.1} parent=90 // pred_check
            _
          $region93: #{_general_mlp_forward_jit.1} parent=90 // pred_check_branch
            %2379 = sbr.rel (0) target = $region95
          $region94: #{_general_mlp_forward_jit.1} parent=90 // pred_region
            // Predicated region
            $region96: #{_general_mlp_forward_jit.1} parent=94 // pred_check
              _
            $region97: #{_general_mlp_forward_jit.1} parent=94 // pred_check_branch
              %2381 = sbr.rel (0) target = $region99
            $region98: #{_general_mlp_forward_jit.1} parent=94 // pred_region
              loop: start=0, step=1, limit=1
              $region100: #{_general_mlp_forward_jit.1} parent=98 // loop_pre_header
                _
              $region101: #{_general_mlp_forward_jit.1} parent=98 // loop_header
                %s2383 = sphi 0, %s2387
                %p2384 = scmp.ge.s32.totalorder %s2383, 1
                %s2388 = sphi %s2371, %s2371
                %s2389 = sphi %s2377, %s2377
              $region102: #{_general_mlp_forward_jit.1} parent=98 // loop_header_branch
                %2386 = sbr.rel (%p2384) target = $region106
              $region103: #{_general_mlp_forward_jit.1} parent=98 // loop_body
                %v2390 = vld [vmem:[%s2388] sm:$0xff]
                %2391 = vst [vmem:[%s2389] sm:$0xff] %v2390
                %v2392 = vld [vmem:[%s2388 + $0x8] sm:$0xff]
                %2393 = vst [vmem:[%s2389 + $0x8] sm:$0xff] %v2392
                %v2394 = vld [vmem:[%s2388 + $0x10] sm:$0xff]
                %2395 = vst [vmem:[%s2389 + $0x20] sm:$0xff] %v2394
                %v2396 = vld [vmem:[%s2388 + $0x18] sm:$0xff]
                %2397 = vst [vmem:[%s2389 + $0x28] sm:$0xff] %v2396
              $region104: #{_general_mlp_forward_jit.1} parent=98 // loop_footer
                %s2387 = sadd.s32 1, %s2383
              $region105: #{_general_mlp_forward_jit.1} parent=98 // loop_footer_branch
                %2382 = sbr.rel target = $region101
              $region106: #{_general_mlp_forward_jit.1} parent=98 // loop_exit
                _
            $region99: #{_general_mlp_forward_jit.1} parent=94 // pred_fallthru
              _
            // Predicated region
            $region107: #{_general_mlp_forward_jit.1} parent=94 // pred_check
              _
            $region108: #{_general_mlp_forward_jit.1} parent=94 // pred_check_branch
              %2399 = sbr.rel target = $region110
            $region109: #{_general_mlp_forward_jit.1} parent=94 // pred_region
              _
            $region110: #{_general_mlp_forward_jit.1} parent=94 // pred_fallthru
              _
          $region95: #{_general_mlp_forward_jit.1} parent=90 // pred_fallthru
            _
          %2400 = vnop
        $region91: #{_general_mlp_forward_jit.1} parent=82 // pred_fallthru
          _
      $region83: #{_general_mlp_forward_jit.1} parent=5 // pred_fallthru
        _
      %p2401 = scmp.le.s32.totalorder 2, %s17
      // Predicated region
      $region111: #{_general_mlp_forward_jit.1} parent=5 // pred_check
        %p2402 = pneg %p2401
      $region112: #{_general_mlp_forward_jit.1} parent=5 // pred_check_branch
        %2404 = sbr.rel (%p2402) target = $region114
      $region113: #{_general_mlp_forward_jit.1} parent=5 // pred_region
        %s2405 = ssub.s32 %s17, 2
        // Predicated region
        $region115: #{_general_mlp_forward_jit.1} parent=113 // pred_check
          %p2406 = pneg %p282
        $region116: #{_general_mlp_forward_jit.1} parent=113 // pred_check_branch
          %2408 = sbr.rel (%p2406) target = $region118
        $region117: #{_general_mlp_forward_jit.1} parent=113 // pred_region
          %s2409 = sand.u32 %s267, 1
          %s2410 = sand.u32 %s267, 1
          %s2411 = smul.addr %s2410, 32
          %s2412 = scalar_lea.vmem [#allocation3], %s2411
        $region118: #{_general_mlp_forward_jit.1} parent=113 // pred_fallthru
          _
      $region114: #{_general_mlp_forward_jit.1} parent=5 // pred_fallthru
        _
    $region6: #{_general_mlp_forward_jit.1} parent=1 // loop_footer
      %s21 = sadd.s32 1, %s17
    $region7: #{_general_mlp_forward_jit.1} parent=1 // loop_footer_branch
      %16 = sbr.rel target = $region3
    $region8: #{_general_mlp_forward_jit.1} parent=1 // loop_exit
      _

</llo_original>
